<compile_context>
chip_gen: v7x
topology: tpu7x:2x2x1
jax: 0.10.0
libtpu: 0.0.40
codegen_flags: <defaults>
</compile_context>

<pallas_src>
import numpy as np
import jax
import jax.numpy as jnp
from jax import lax
from jax.experimental import pallas as pl
from jax.experimental.pallas import tpu as pltpu

n_qubits = 4
q_depth = 6
DIM = 2 ** n_qubits        # 16
RDIM = 2 * DIM             # 32: stacked [re ; im] real representation
MAX_TILE_B = 512           # batch tile cap (lane axis); review-recommended sweep point

# ------------------------------------------------------------------
# Static circuit "design" (deterministic, exercises every gate type).
# ------------------------------------------------------------------
_rot_choices = ["x", "y", "z"]
_gate_choices = ["H", "Px", "Py", "Pz", "CNot", "CZ", "Tof", "CSwap", "I"]
design = {}
for _l in range(6):
    for _n in range(4):
        _k = f"{_l}{_n}"
        design[_k + "0"] = ((_l + _n) % 2 == 0)
        design[_k + "1"] = _rot_choices[(_l + _n) % 3]
        design[_k + "2"] = _gate_choices[(_l * 4 + _n) % len(_gate_choices)]

# ------------------------------------------------------------------
# Base gate matrices (numpy, complex) and embedding into 16x16.
# Pennylane default.qubit convention: wire 0 is the most-significant bit.
# ------------------------------------------------------------------
H2 = np.array([[1, 1], [1, -1]], dtype=np.complex128) / np.sqrt(2.0)
X2 = np.array([[0, 1], [1, 0]], dtype=np.complex128)
Y2 = np.array([[0, -1j], [1j, 0]], dtype=np.complex128)
Z2 = np.array([[1, 0], [0, -1]], dtype=np.complex128)
K2C = np.array([[0, -1], [1, 0]], dtype=np.complex128)   # -i*Y (real RY generator)
CNOT4 = np.array([[1, 0, 0, 0], [0, 1, 0, 0], [0, 0, 0, 1], [0, 0, 1, 0]],
                 dtype=np.complex128)
CZ4 = np.diag([1, 1, 1, -1]).astype(np.complex128)
CSWAP8 = np.eye(8, dtype=np.complex128)
CSWAP8[[5, 6]] = CSWAP8[[6, 5]]
TOF8 = np.eye(8, dtype=np.complex128)
TOF8[[6, 7]] = TOF8[[7, 6]]


def embed(gate, wires):
    """Embed a 2^k x 2^k gate acting on `wires` into the full 16x16 unitary."""
    k = len(wires)
    U = np.zeros((DIM, DIM), dtype=np.complex128)
    for i in range(DIM):
        bits = [(i >> (n_qubits - 1 - w)) & 1 for w in range(n_qubits)]
        sub_i = 0
        for w in wires:
            sub_i = (sub_i << 1) | bits[w]
        for sub_j in range(2 ** k):
            amp = gate[sub_j, sub_i]
            if amp != 0:
                jbits = list(bits)
                for m, w in enumerate(wires):
                    jbits[w] = (sub_j >> (k - 1 - m)) & 1
                j = 0
                for w in range(n_qubits):
                    j = (j << 1) | jbits[w]
                U[j, i] = amp
    return U


# ------------------------------------------------------------------
# Compile the circuit (trace-time, static) into an op list.
#   ('fixed', U_complex)                 -- non-parameterized gate
#   ('rot', axis, wire, ('x', node))     -- RY(x[node]) data rotation
#   ('rot', axis, wire, ('w', l, n))     -- R_axis(w[l, n]) weight rotation
# ------------------------------------------------------------------
REF_OPS = []
for layer in range(q_depth):
    for node in range(n_qubits):
        key = f"{layer % 6}{node % 4}"
        if design[key + "0"]:
            REF_OPS.append(("rot", "y", node, ("x", node)))
        g1 = design[key + "1"]
        if g1 in ("x", "y", "z"):
            REF_OPS.append(("rot", g1, node, ("w", layer, node)))
        g2 = design[key + "2"]
        nxt, nx2 = (node + 1) % n_qubits, (node + 2) % n_qubits
        if g2 == "H":
            REF_OPS.append(("fixed", embed(H2, [node])))
        elif g2 == "Px":
            REF_OPS.append(("fixed", embed(X2, [node])))
        elif g2 == "Py":
            REF_OPS.append(("fixed", embed(Y2, [node])))
        elif g2 == "Pz":
            REF_OPS.append(("fixed", embed(Z2, [node])))
        elif g2 == "CNot":
            REF_OPS.append(("fixed", embed(CNOT4, [node, nxt])))
        elif g2 == "CZ":
            REF_OPS.append(("fixed", embed(CZ4, [node, nxt])))
        elif g2 == "CSwap":
            REF_OPS.append(("fixed", embed(CSWAP8, [node, nxt, nx2])))
        elif g2 == "Tof":
            REF_OPS.append(("fixed", embed(TOF8, [node, nxt, nx2])))
        # 'I': no gate


# ------------------------------------------------------------------
# Fused-segment construction (static structure; weight-dependent matrices are
# built at runtime in the wrapper, once per call).
# Real 32x32 representation of a complex 16x16 matrix M = R + iI:
#   C(M) = [[R, -I], [I, R]],   C(A) C(B) = C(A B),
#   C(M) @ [re; im] = [Re(M psi); Im(M psi)].
# ------------------------------------------------------------------
def c_to_real32(U):
    R, I = np.real(U), np.imag(U)
    return np.block([[R, -I], [I, R]]).astype(np.float32)


def _param_A(axis, wire):
    """Gate(theta) = cos(theta/2) * I32 + sin(theta/2) * A  (real 32x32)."""
    if axis == "x":     # RX = c*I - i s*X
        return c_to_real32(-1j * embed(X2, [wire]))
    if axis == "y":     # RY = c*I + s*K   (K real)
        return c_to_real32(embed(K2C, [wire]))
    return c_to_real32(-1j * embed(Z2, [wire]))   # RZ = c*I - i s*Z


SCHEDULE = []   # static: ('rot', wire) data rotation, or ('seg', idx) fused segment
SEGMENTS = []   # per segment: list of ('const', M32) | ('param', layer, node, A32)


def _build_segments():
    cur = []
    pending = None   # running complex 16x16 product of consecutive fixed gates

    def flush_const():
        nonlocal pending
        if pending is not None:
            cur.append(("const", c_to_real32(pending)))
            pending = None

    def flush_segment():
        nonlocal cur
        flush_const()
        if cur:
            SCHEDULE.append(("seg", len(SEGMENTS)))
            SEGMENTS.append(cur)
            cur = []

    for op in REF_OPS:
        if op[0] == "rot" and op[3][0] == "x":      # data rotation = segment boundary
            flush_segment()
            SCHEDULE.append(("rot", op[2]))
        elif op[0] == "rot":                        # weight rotation
            flush_const()
            _, axis, wire, (_, l, n) = op
            cur.append(("param", l, n, _param_A(axis, wire)))
        else:                                       # fixed gate: fold into constant
            U = op[1]
            pending = U if pending is None else U @ pending
    flush_segment()


_build_segments()
N_SEG = len(SEGMENTS)                     # 12 for this design

I32_NP = np.eye(RDIM, dtype=np.float32)


def build_segment_mats(w):
    """Fold weight rotations + fixed gates into N_SEG real 32x32 matrices.

    Runs in the JAX wrapper (tiny 32x32 matmuls, once per call).
    """
    half = 0.5 * w
    cw, sw = jnp.cos(half), jnp.sin(half)
    eye = jnp.asarray(I32_NP)
    mats = []
    for items in SEGMENTS:
        M = None
        for item in items:
            if item[0] == "const":
                G = jnp.asarray(item[1])
            else:
                _, l, n, A = item
                G = cw[l, n] * eye + sw[l, n] * jnp.asarray(A)
            M = G if M is None else G @ M
        mats.append(M)
    return jnp.stack(mats)                # (N_SEG, 32, 32) float32


# ------------------------------------------------------------------
# Pallas kernel.
# x_ref   : (1, n_qubits, 2*tile_b)  angles; columns [0:T] = x1 tile, [T:2T] = x2
# seg_ref : (N_SEG, 32, 32)          fused segment matrices (weight-dependent)
# out_ref : (1, tile_b)              fidelities, lane-dense
#
# Data RY(theta) on wire w:  psi' = c*psi + s*(K_w psi), where K_w swaps
# amplitude rows j <-> j^m (m = 2^(3-w)) with a sign: (K_w psi)[j] =
# +psi[j^m] if bit_m(j)==1 else -psi[j^m].  Implemented with two sublane
# rolls (XLU) + a row-bit select (VPU) — no MXU round-trip.
# ------------------------------------------------------------------
def qnet_kernel(x_ref, seg_ref, out_ref):
    x = x_ref[0]                                            # (4, NB)
    nb = x.shape[-1]
    tb = out_ref.shape[-1]

    # Hoisted row index: reused for the initial state and all rotation masks.
    row = lax.broadcasted_iota(jnp.int32, (RDIM, nb), 0)

    # Hoisted + pre-broadcast per-wire cos/sin of half data angles (3 uses each;
    # broadcast_in_dim is not CSE'd, so broadcast once here).
    cs = []
    for wi in range(n_qubits):
        th = 0.5 * x[wi:wi + 1, :]                          # (1, NB)
        cs.append((jnp.broadcast_to(jnp.cos(th), (RDIM, nb)),
                   jnp.broadcast_to(jnp.sin(th), (RDIM, nb))))

    # |0000> followed by H on every wire -> uniform REAL amplitude 1/sqrt(16)=0.25.
    state = jnp.where(row < DIM, jnp.float32(0.25), jnp.float32(0.0))   # (32, NB)

    # Static unroll: 12 fused-segment MXU matmuls + 12 data RY rotations on XLU/VPU.
    for kind, idx in SCHEDULE:
        if kind == "seg":
            state = jnp.dot(seg_ref[idx], state, preferred_element_type=jnp.float32)
        else:  # data RY(x[idx]) on wire idx
            m = 1 << (n_qubits - 1 - idx)                    # sublane XOR distance
            down = pltpu.roll(state, m, axis=0)              # state[j - m]
            up = pltpu.roll(state, RDIM - m, axis=0)         # state[j + m]
            mask = (row & m) != 0                            # bit_m of row index
            c, s = cs[idx]
            base = c * state
            state = jnp.where(mask, base + s * down, base - s * up)

    # Split the lane-concatenated batch back into psi(x1) / psi(x2).
    re1, im1 = state[:DIM, :tb], state[DIM:, :tb]
    re2, im2 = state[:DIM, tb:], state[DIM:, tb:]
    # <psi2|psi1> and its squared modulus (== probs[0] of U1 then adjoint(U2)).
    ire = jnp.sum(re2 * re1 + im2 * im1, axis=0, keepdims=True)    # (1, tb)
    iim = jnp.sum(re2 * im1 - im2 * re1, axis=0, keepdims=True)
    out_ref[...] = ire * ire + iim * iim                           # lane-dense store


@jax.jit
def qnet_forward(x1, x2, q_weights):
    B = x1.shape[0]
    w = q_weights.astype(jnp.float32).reshape(q_depth, n_qubits)

    # Lane-dense batch tile: as wide as possible (up to MAX_TILE_B) so the MXU
    # sees many independent lane groups per op; for big batches tiles stay at
    # 512 so there are >= 2 grid steps for v7x dual-TC ("parallel") sharding.
    b_align = ((B + 127) // 128) * 128
    tile_b = min(MAX_TILE_B, b_align)
    n_tiles = (B + tile_b - 1) // tile_b
    B_pad = n_tiles * tile_b

    def tiles(x):
        xt = jnp.zeros((n_qubits, B_pad), jnp.float32).at[:, :B].set(
            x.astype(jnp.float32).T)
        return xt.reshape(n_qubits, n_tiles, tile_b).transpose(1, 0, 2)

    xcat = jnp.concatenate([tiles(x1), tiles(x2)], axis=2)     # (n_tiles, 4, 2*tile_b)
    seg_mats = build_segment_mats(w)                           # (N_SEG, 32, 32)

    out = pl.pallas_call(
        qnet_kernel,
        out_shape=jax.ShapeDtypeStruct((1, B_pad), jnp.float32),
        grid=(n_tiles,),
        in_specs=[
            pl.BlockSpec((1, n_qubits, 2 * tile_b), lambda i: (i, 0, 0)),
            # grid-invariant; default double-buffering costs ~100 KiB VMEM which
            # is negligible here, so no single-buffering override.
            pl.BlockSpec((N_SEG, RDIM, RDIM), lambda i: (0, 0, 0)),
        ],
        out_specs=pl.BlockSpec((1, tile_b), lambda i: (0, i)),
        compiler_params=pltpu.CompilerParams(
            dimension_semantics=("parallel",)),
    )(xcat, seg_mats)
    return out[0, :B]


# ------------------------------------------------------------------
# float64 numpy reference (mirrors the PyTorch/Pennylane semantics exactly).
# ------------------------------------------------------------------
def _rot2(axis, theta):
    c, s = np.cos(theta / 2.0), np.sin(theta / 2.0)
    if axis == "x":
        return np.array([[c, -1j * s], [-1j * s, c]], dtype=np.complex128)
    if axis == "y":
        return np.array([[c, -s], [s, c]], dtype=np.complex128)
    return np.array([[np.exp(-1j * theta / 2.0), 0],
                     [0, np.exp(1j * theta / 2.0)]], dtype=np.complex128)


def ref_forward(x1, x2, w):
    def state(x):
        psi = np.zeros(DIM, dtype=np.complex128)
        psi[0] = 1.0
        for q in range(n_qubits):
            psi = embed(H2, [q]) @ psi
        for op in REF_OPS:
            if op[0] == "fixed":
                psi = op[1] @ psi
            else:
                _, axis, wire, src = op
                theta = x[src[1]] if src[0] == "x" else w[src[1], src[2]]
                psi = embed(_rot2(axis, float(theta)), [wire]) @ psi
        return psi

    fids = []
    for a, b in zip(x1, x2):
        p1, p2 = state(a), state(b)
        fids.append(abs(np.vdot(p2, p1)) ** 2)
    return np.array(fids)


if __name__ == "__main__":
    key = jax.random.PRNGKey(0)
    k1, k2, k3 = jax.random.split(key, 3)
    B = 2
    x1 = jax.random.normal(k1, (B, n_qubits), dtype=jnp.float32)
    x2 = jax.random.normal(k2, (B, n_qubits), dtype=jnp.float32)
    q_params = jax.random.normal(k3, (q_depth, n_qubits), dtype=jnp.float32)

    fid = qnet_forward(x1, x2, q_params)
    jax.block_until_ready(fid)

    ref = ref_forward(np.asarray(x1, np.float64), np.asarray(x2, np.float64),
                      np.asarray(q_params, np.float64))
    assert np.allclose(np.asarray(fid), ref, atol=2e-3, rtol=2e-3), (np.asarray(fid), ref)
    print("KERNEL_OK")
</pallas_src>

<mosaic_0001>
module attributes {stable_mosaic.version = 11 : i64} {
  func.func @qnet_kernel(%arg0: i32, %arg1: memref<1x4x256xf32, #tpu.memory_space<vmem>>, %arg2: memref<12x32x32xf32, #tpu.memory_space<vmem>>, %arg3: memref<1x128xf32, #tpu.memory_space<vmem>>) attributes {dimension_semantics = [#tpu.dimension_semantics<parallel>], iteration_bounds = array<i64: 1>, scalar_prefetch = 0 : i64, scratch_operands = 0 : i64, tpu.core_type = #tpu.core_type<tc>, window_params = [{transform_indices = @transform_0, window_bounds = array<i64: 1, 4, 256>}, {pipeline_mode = #tpu.pipeline_mode<synchronous>, transform_indices = @transform_1, window_bounds = array<i64: 12, 32, 32>}, {transform_indices = @transform_2, window_bounds = array<i64: 1, 128>}]} {
    %c0 = arith.constant 0 : index
    %c0_0 = arith.constant 0 : index
    %c0_1 = arith.constant 0 : index
    %0 = vector.load %arg1[%c0, %c0_0, %c0_1] : memref<1x4x256xf32, #tpu.memory_space<vmem>>, vector<1x4x256xf32>
    %1 = vector.shape_cast %0 : vector<1x4x256xf32> to vector<4x256xf32>
    %2 = tpu.iota {dimensions = array<i32: 0>} : vector<32x256xi32>
    %3 = vector.extract_strided_slice %1 {offsets = [0, 0], sizes = [1, 256], strides = [1, 1]} : vector<4x256xf32> to vector<1x256xf32>
    %cst = arith.constant 5.000000e-01 : f32
    %4 = vector.broadcast %cst : f32 to vector<1x256xf32>
    %5 = arith.mulf %4, %3 : vector<1x256xf32>
    %6 = math.cos %5 : vector<1x256xf32>
    %7 = vector.shape_cast %6 : vector<1x256xf32> to vector<1x256xf32>
    %8 = vector.broadcast %7 : vector<1x256xf32> to vector<32x256xf32>
    %9 = math.sin %5 : vector<1x256xf32>
    %10 = vector.shape_cast %9 : vector<1x256xf32> to vector<1x256xf32>
    %11 = vector.broadcast %10 : vector<1x256xf32> to vector<32x256xf32>
    %12 = vector.extract_strided_slice %1 {offsets = [1, 0], sizes = [1, 256], strides = [1, 1]} : vector<4x256xf32> to vector<1x256xf32>
    %cst_2 = arith.constant 5.000000e-01 : f32
    %13 = vector.broadcast %cst_2 : f32 to vector<1x256xf32>
    %14 = arith.mulf %13, %12 : vector<1x256xf32>
    %15 = math.cos %14 : vector<1x256xf32>
    %16 = vector.shape_cast %15 : vector<1x256xf32> to vector<1x256xf32>
    %17 = vector.broadcast %16 : vector<1x256xf32> to vector<32x256xf32>
    %18 = math.sin %14 : vector<1x256xf32>
    %19 = vector.shape_cast %18 : vector<1x256xf32> to vector<1x256xf32>
    %20 = vector.broadcast %19 : vector<1x256xf32> to vector<32x256xf32>
    %21 = vector.extract_strided_slice %1 {offsets = [2, 0], sizes = [1, 256], strides = [1, 1]} : vector<4x256xf32> to vector<1x256xf32>
    %cst_3 = arith.constant 5.000000e-01 : f32
    %22 = vector.broadcast %cst_3 : f32 to vector<1x256xf32>
    %23 = arith.mulf %22, %21 : vector<1x256xf32>
    %24 = math.cos %23 : vector<1x256xf32>
    %25 = vector.shape_cast %24 : vector<1x256xf32> to vector<1x256xf32>
    %26 = vector.broadcast %25 : vector<1x256xf32> to vector<32x256xf32>
    %27 = math.sin %23 : vector<1x256xf32>
    %28 = vector.shape_cast %27 : vector<1x256xf32> to vector<1x256xf32>
    %29 = vector.broadcast %28 : vector<1x256xf32> to vector<32x256xf32>
    %30 = vector.extract_strided_slice %1 {offsets = [3, 0], sizes = [1, 256], strides = [1, 1]} : vector<4x256xf32> to vector<1x256xf32>
    %cst_4 = arith.constant 5.000000e-01 : f32
    %31 = vector.broadcast %cst_4 : f32 to vector<1x256xf32>
    %32 = arith.mulf %31, %30 : vector<1x256xf32>
    %33 = math.cos %32 : vector<1x256xf32>
    %34 = vector.shape_cast %33 : vector<1x256xf32> to vector<1x256xf32>
    %35 = vector.broadcast %34 : vector<1x256xf32> to vector<32x256xf32>
    %36 = math.sin %32 : vector<1x256xf32>
    %37 = vector.shape_cast %36 : vector<1x256xf32> to vector<1x256xf32>
    %38 = vector.broadcast %37 : vector<1x256xf32> to vector<32x256xf32>
    %c16_i32 = arith.constant 16 : i32
    %39 = vector.broadcast %c16_i32 : i32 to vector<32x256xi32>
    %40 = arith.cmpi slt, %2, %39 : vector<32x256xi32>
    %cst_5 = arith.constant 2.500000e-01 : f32
    %cst_6 = arith.constant 0.000000e+00 : f32
    %41 = vector.broadcast %cst_5 : f32 to vector<32x256xf32>
    %42 = vector.broadcast %cst_6 : f32 to vector<32x256xf32>
    %43 = arith.select %40, %41, %42 : vector<32x256xi1>, vector<32x256xf32>
    %c8_i32 = arith.constant 8 : i32
    %44 = tpu.dynamic_rotate %43 by %c8_i32 dim 0 : vector<32x256xf32>, i32 -> vector<32x256xf32>
    %c24_i32 = arith.constant 24 : i32
    %45 = tpu.dynamic_rotate %43 by %c24_i32 dim 0 : vector<32x256xf32>, i32 -> vector<32x256xf32>
    %c8_i32_7 = arith.constant 8 : i32
    %46 = vector.broadcast %c8_i32_7 : i32 to vector<32x256xi32>
    %47 = arith.andi %2, %46 : vector<32x256xi32>
    %c0_i32 = arith.constant 0 : i32
    %48 = vector.broadcast %c0_i32 : i32 to vector<32x256xi32>
    %49 = arith.cmpi ne, %47, %48 : vector<32x256xi32>
    %50 = arith.mulf %8, %43 : vector<32x256xf32>
    %51 = arith.mulf %11, %44 : vector<32x256xf32>
    %52 = arith.addf %50, %51 : vector<32x256xf32>
    %53 = arith.mulf %11, %45 : vector<32x256xf32>
    %54 = arith.subf %50, %53 : vector<32x256xf32>
    %55 = arith.select %49, %52, %54 : vector<32x256xi1>, vector<32x256xf32>
    %c0_8 = arith.constant 0 : index
    %c0_9 = arith.constant 0 : index
    %c0_10 = arith.constant 0 : index
    %56 = vector.load %arg2[%c0_8, %c0_9, %c0_10] : memref<12x32x32xf32, #tpu.memory_space<vmem>>, vector<1x32x32xf32>
    %57 = vector.shape_cast %56 : vector<1x32x32xf32> to vector<32x32xf32>
    %cst_11 = arith.constant dense<0.000000e+00> : vector<32x256xf32>
    %58 = tpu.matmul %57, %55, %cst_11 {dimension_numbers = #tpu.dot_dimension_numbers<[1], [0], [0], [1], [0, 0, 1, 1], [], []>} : vector<32x32xf32>, vector<32x256xf32>, vector<32x256xf32> -> vector<32x256xf32>
    %c2_i32 = arith.constant 2 : i32
    %59 = tpu.dynamic_rotate %58 by %c2_i32 dim 0 : vector<32x256xf32>, i32 -> vector<32x256xf32>
    %c30_i32 = arith.constant 30 : i32
    %60 = tpu.dynamic_rotate %58 by %c30_i32 dim 0 : vector<32x256xf32>, i32 -> vector<32x256xf32>
    %c2_i32_12 = arith.constant 2 : i32
    %61 = vector.broadcast %c2_i32_12 : i32 to vector<32x256xi32>
    %62 = arith.andi %2, %61 : vector<32x256xi32>
    %c0_i32_13 = arith.constant 0 : i32
    %63 = vector.broadcast %c0_i32_13 : i32 to vector<32x256xi32>
    %64 = arith.cmpi ne, %62, %63 : vector<32x256xi32>
    %65 = arith.mulf %26, %58 : vector<32x256xf32>
    %66 = arith.mulf %29, %59 : vector<32x256xf32>
    %67 = arith.addf %65, %66 : vector<32x256xf32>
    %68 = arith.mulf %29, %60 : vector<32x256xf32>
    %69 = arith.subf %65, %68 : vector<32x256xf32>
    %70 = arith.select %64, %67, %69 : vector<32x256xi1>, vector<32x256xf32>
    %c1 = arith.constant 1 : index
    %c0_14 = arith.constant 0 : index
    %c0_15 = arith.constant 0 : index
    %71 = vector.load %arg2[%c1, %c0_14, %c0_15] : memref<12x32x32xf32, #tpu.memory_space<vmem>>, vector<1x32x32xf32>
    %72 = vector.shape_cast %71 : vector<1x32x32xf32> to vector<32x32xf32>
    %cst_16 = arith.constant dense<0.000000e+00> : vector<32x256xf32>
    %73 = tpu.matmul %72, %70, %cst_16 {dimension_numbers = #tpu.dot_dimension_numbers<[1], [0], [0], [1], [0, 0, 1, 1], [], []>} : vector<32x32xf32>, vector<32x256xf32>, vector<32x256xf32> -> vector<32x256xf32>
    %c4_i32 = arith.constant 4 : i32
    %74 = tpu.dynamic_rotate %73 by %c4_i32 dim 0 : vector<32x256xf32>, i32 -> vector<32x256xf32>
    %c28_i32 = arith.constant 28 : i32
    %75 = tpu.dynamic_rotate %73 by %c28_i32 dim 0 : vector<32x256xf32>, i32 -> vector<32x256xf32>
    %c4_i32_17 = arith.constant 4 : i32
    %76 = vector.broadcast %c4_i32_17 : i32 to vector<32x256xi32>
    %77 = arith.andi %2, %76 : vector<32x256xi32>
    %c0_i32_18 = arith.constant 0 : i32
    %78 = vector.broadcast %c0_i32_18 : i32 to vector<32x256xi32>
    %79 = arith.cmpi ne, %77, %78 : vector<32x256xi32>
    %80 = arith.mulf %17, %73 : vector<32x256xf32>
    %81 = arith.mulf %20, %74 : vector<32x256xf32>
    %82 = arith.addf %80, %81 : vector<32x256xf32>
    %83 = arith.mulf %20, %75 : vector<32x256xf32>
    %84 = arith.subf %80, %83 : vector<32x256xf32>
    %85 = arith.select %79, %82, %84 : vector<32x256xi1>, vector<32x256xf32>
    %c2 = arith.constant 2 : index
    %c0_19 = arith.constant 0 : index
    %c0_20 = arith.constant 0 : index
    %86 = vector.load %arg2[%c2, %c0_19, %c0_20] : memref<12x32x32xf32, #tpu.memory_space<vmem>>, vector<1x32x32xf32>
    %87 = vector.shape_cast %86 : vector<1x32x32xf32> to vector<32x32xf32>
    %cst_21 = arith.constant dense<0.000000e+00> : vector<32x256xf32>
    %88 = tpu.matmul %87, %85, %cst_21 {dimension_numbers = #tpu.dot_dimension_numbers<[1], [0], [0], [1], [0, 0, 1, 1], [], []>} : vector<32x32xf32>, vector<32x256xf32>, vector<32x256xf32> -> vector<32x256xf32>
    %c1_i32 = arith.constant 1 : i32
    %89 = tpu.dynamic_rotate %88 by %c1_i32 dim 0 : vector<32x256xf32>, i32 -> vector<32x256xf32>
    %c31_i32 = arith.constant 31 : i32
    %90 = tpu.dynamic_rotate %88 by %c31_i32 dim 0 : vector<32x256xf32>, i32 -> vector<32x256xf32>
    %c1_i32_22 = arith.constant 1 : i32
    %91 = vector.broadcast %c1_i32_22 : i32 to vector<32x256xi32>
    %92 = arith.andi %2, %91 : vector<32x256xi32>
    %c0_i32_23 = arith.constant 0 : i32
    %93 = vector.broadcast %c0_i32_23 : i32 to vector<32x256xi32>
    %94 = arith.cmpi ne, %92, %93 : vector<32x256xi32>
    %95 = arith.mulf %35, %88 : vector<32x256xf32>
    %96 = arith.mulf %38, %89 : vector<32x256xf32>
    %97 = arith.addf %95, %96 : vector<32x256xf32>
    %98 = arith.mulf %38, %90 : vector<32x256xf32>
    %99 = arith.subf %95, %98 : vector<32x256xf32>
    %100 = arith.select %94, %97, %99 : vector<32x256xi1>, vector<32x256xf32>
    %c3 = arith.constant 3 : index
    %c0_24 = arith.constant 0 : index
    %c0_25 = arith.constant 0 : index
    %101 = vector.load %arg2[%c3, %c0_24, %c0_25] : memref<12x32x32xf32, #tpu.memory_space<vmem>>, vector<1x32x32xf32>
    %102 = vector.shape_cast %101 : vector<1x32x32xf32> to vector<32x32xf32>
    %cst_26 = arith.constant dense<0.000000e+00> : vector<32x256xf32>
    %103 = tpu.matmul %102, %100, %cst_26 {dimension_numbers = #tpu.dot_dimension_numbers<[1], [0], [0], [1], [0, 0, 1, 1], [], []>} : vector<32x32xf32>, vector<32x256xf32>, vector<32x256xf32> -> vector<32x256xf32>
    %c8_i32_27 = arith.constant 8 : i32
    %104 = tpu.dynamic_rotate %103 by %c8_i32_27 dim 0 : vector<32x256xf32>, i32 -> vector<32x256xf32>
    %c24_i32_28 = arith.constant 24 : i32
    %105 = tpu.dynamic_rotate %103 by %c24_i32_28 dim 0 : vector<32x256xf32>, i32 -> vector<32x256xf32>
    %c8_i32_29 = arith.constant 8 : i32
    %106 = vector.broadcast %c8_i32_29 : i32 to vector<32x256xi32>
    %107 = arith.andi %2, %106 : vector<32x256xi32>
    %c0_i32_30 = arith.constant 0 : i32
    %108 = vector.broadcast %c0_i32_30 : i32 to vector<32x256xi32>
    %109 = arith.cmpi ne, %107, %108 : vector<32x256xi32>
    %110 = arith.mulf %8, %103 : vector<32x256xf32>
    %111 = arith.mulf %11, %104 : vector<32x256xf32>
    %112 = arith.addf %110, %111 : vector<32x256xf32>
    %113 = arith.mulf %11, %105 : vector<32x256xf32>
    %114 = arith.subf %110, %113 : vector<32x256xf32>
    %115 = arith.select %109, %112, %114 : vector<32x256xi1>, vector<32x256xf32>
    %c4 = arith.constant 4 : index
    %c0_31 = arith.constant 0 : index
    %c0_32 = arith.constant 0 : index
    %116 = vector.load %arg2[%c4, %c0_31, %c0_32] : memref<12x32x32xf32, #tpu.memory_space<vmem>>, vector<1x32x32xf32>
    %117 = vector.shape_cast %116 : vector<1x32x32xf32> to vector<32x32xf32>
    %cst_33 = arith.constant dense<0.000000e+00> : vector<32x256xf32>
    %118 = tpu.matmul %117, %115, %cst_33 {dimension_numbers = #tpu.dot_dimension_numbers<[1], [0], [0], [1], [0, 0, 1, 1], [], []>} : vector<32x32xf32>, vector<32x256xf32>, vector<32x256xf32> -> vector<32x256xf32>
    %c2_i32_34 = arith.constant 2 : i32
    %119 = tpu.dynamic_rotate %118 by %c2_i32_34 dim 0 : vector<32x256xf32>, i32 -> vector<32x256xf32>
    %c30_i32_35 = arith.constant 30 : i32
    %120 = tpu.dynamic_rotate %118 by %c30_i32_35 dim 0 : vector<32x256xf32>, i32 -> vector<32x256xf32>
    %c2_i32_36 = arith.constant 2 : i32
    %121 = vector.broadcast %c2_i32_36 : i32 to vector<32x256xi32>
    %122 = arith.andi %2, %121 : vector<32x256xi32>
    %c0_i32_37 = arith.constant 0 : i32
    %123 = vector.broadcast %c0_i32_37 : i32 to vector<32x256xi32>
    %124 = arith.cmpi ne, %122, %123 : vector<32x256xi32>
    %125 = arith.mulf %26, %118 : vector<32x256xf32>
    %126 = arith.mulf %29, %119 : vector<32x256xf32>
    %127 = arith.addf %125, %126 : vector<32x256xf32>
    %128 = arith.mulf %29, %120 : vector<32x256xf32>
    %129 = arith.subf %125, %128 : vector<32x256xf32>
    %130 = arith.select %124, %127, %129 : vector<32x256xi1>, vector<32x256xf32>
    %c5 = arith.constant 5 : index
    %c0_38 = arith.constant 0 : index
    %c0_39 = arith.constant 0 : index
    %131 = vector.load %arg2[%c5, %c0_38, %c0_39] : memref<12x32x32xf32, #tpu.memory_space<vmem>>, vector<1x32x32xf32>
    %132 = vector.shape_cast %131 : vector<1x32x32xf32> to vector<32x32xf32>
    %cst_40 = arith.constant dense<0.000000e+00> : vector<32x256xf32>
    %133 = tpu.matmul %132, %130, %cst_40 {dimension_numbers = #tpu.dot_dimension_numbers<[1], [0], [0], [1], [0, 0, 1, 1], [], []>} : vector<32x32xf32>, vector<32x256xf32>, vector<32x256xf32> -> vector<32x256xf32>
    %c4_i32_41 = arith.constant 4 : i32
    %134 = tpu.dynamic_rotate %133 by %c4_i32_41 dim 0 : vector<32x256xf32>, i32 -> vector<32x256xf32>
    %c28_i32_42 = arith.constant 28 : i32
    %135 = tpu.dynamic_rotate %133 by %c28_i32_42 dim 0 : vector<32x256xf32>, i32 -> vector<32x256xf32>
    %c4_i32_43 = arith.constant 4 : i32
    %136 = vector.broadcast %c4_i32_43 : i32 to vector<32x256xi32>
    %137 = arith.andi %2, %136 : vector<32x256xi32>
    %c0_i32_44 = arith.constant 0 : i32
    %138 = vector.broadcast %c0_i32_44 : i32 to vector<32x256xi32>
    %139 = arith.cmpi ne, %137, %138 : vector<32x256xi32>
    %140 = arith.mulf %17, %133 : vector<32x256xf32>
    %141 = arith.mulf %20, %134 : vector<32x256xf32>
    %142 = arith.addf %140, %141 : vector<32x256xf32>
    %143 = arith.mulf %20, %135 : vector<32x256xf32>
    %144 = arith.subf %140, %143 : vector<32x256xf32>
    %145 = arith.select %139, %142, %144 : vector<32x256xi1>, vector<32x256xf32>
    %c6 = arith.constant 6 : index
    %c0_45 = arith.constant 0 : index
    %c0_46 = arith.constant 0 : index
    %146 = vector.load %arg2[%c6, %c0_45, %c0_46] : memref<12x32x32xf32, #tpu.memory_space<vmem>>, vector<1x32x32xf32>
    %147 = vector.shape_cast %146 : vector<1x32x32xf32> to vector<32x32xf32>
    %cst_47 = arith.constant dense<0.000000e+00> : vector<32x256xf32>
    %148 = tpu.matmul %147, %145, %cst_47 {dimension_numbers = #tpu.dot_dimension_numbers<[1], [0], [0], [1], [0, 0, 1, 1], [], []>} : vector<32x32xf32>, vector<32x256xf32>, vector<32x256xf32> -> vector<32x256xf32>
    %c1_i32_48 = arith.constant 1 : i32
    %149 = tpu.dynamic_rotate %148 by %c1_i32_48 dim 0 : vector<32x256xf32>, i32 -> vector<32x256xf32>
    %c31_i32_49 = arith.constant 31 : i32
    %150 = tpu.dynamic_rotate %148 by %c31_i32_49 dim 0 : vector<32x256xf32>, i32 -> vector<32x256xf32>
    %c1_i32_50 = arith.constant 1 : i32
    %151 = vector.broadcast %c1_i32_50 : i32 to vector<32x256xi32>
    %152 = arith.andi %2, %151 : vector<32x256xi32>
    %c0_i32_51 = arith.constant 0 : i32
    %153 = vector.broadcast %c0_i32_51 : i32 to vector<32x256xi32>
    %154 = arith.cmpi ne, %152, %153 : vector<32x256xi32>
    %155 = arith.mulf %35, %148 : vector<32x256xf32>
    %156 = arith.mulf %38, %149 : vector<32x256xf32>
    %157 = arith.addf %155, %156 : vector<32x256xf32>
    %158 = arith.mulf %38, %150 : vector<32x256xf32>
    %159 = arith.subf %155, %158 : vector<32x256xf32>
    %160 = arith.select %154, %157, %159 : vector<32x256xi1>, vector<32x256xf32>
    %c7 = arith.constant 7 : index
    %c0_52 = arith.constant 0 : index
    %c0_53 = arith.constant 0 : index
    %161 = vector.load %arg2[%c7, %c0_52, %c0_53] : memref<12x32x32xf32, #tpu.memory_space<vmem>>, vector<1x32x32xf32>
    %162 = vector.shape_cast %161 : vector<1x32x32xf32> to vector<32x32xf32>
    %cst_54 = arith.constant dense<0.000000e+00> : vector<32x256xf32>
    %163 = tpu.matmul %162, %160, %cst_54 {dimension_numbers = #tpu.dot_dimension_numbers<[1], [0], [0], [1], [0, 0, 1, 1], [], []>} : vector<32x32xf32>, vector<32x256xf32>, vector<32x256xf32> -> vector<32x256xf32>
    %c8_i32_55 = arith.constant 8 : i32
    %164 = tpu.dynamic_rotate %163 by %c8_i32_55 dim 0 : vector<32x256xf32>, i32 -> vector<32x256xf32>
    %c24_i32_56 = arith.constant 24 : i32
    %165 = tpu.dynamic_rotate %163 by %c24_i32_56 dim 0 : vector<32x256xf32>, i32 -> vector<32x256xf32>
    %c8_i32_57 = arith.constant 8 : i32
    %166 = vector.broadcast %c8_i32_57 : i32 to vector<32x256xi32>
    %167 = arith.andi %2, %166 : vector<32x256xi32>
    %c0_i32_58 = arith.constant 0 : i32
    %168 = vector.broadcast %c0_i32_58 : i32 to vector<32x256xi32>
    %169 = arith.cmpi ne, %167, %168 : vector<32x256xi32>
    %170 = arith.mulf %8, %163 : vector<32x256xf32>
    %171 = arith.mulf %11, %164 : vector<32x256xf32>
    %172 = arith.addf %170, %171 : vector<32x256xf32>
    %173 = arith.mulf %11, %165 : vector<32x256xf32>
    %174 = arith.subf %170, %173 : vector<32x256xf32>
    %175 = arith.select %169, %172, %174 : vector<32x256xi1>, vector<32x256xf32>
    %c8 = arith.constant 8 : index
    %c0_59 = arith.constant 0 : index
    %c0_60 = arith.constant 0 : index
    %176 = vector.load %arg2[%c8, %c0_59, %c0_60] : memref<12x32x32xf32, #tpu.memory_space<vmem>>, vector<1x32x32xf32>
    %177 = vector.shape_cast %176 : vector<1x32x32xf32> to vector<32x32xf32>
    %cst_61 = arith.constant dense<0.000000e+00> : vector<32x256xf32>
    %178 = tpu.matmul %177, %175, %cst_61 {dimension_numbers = #tpu.dot_dimension_numbers<[1], [0], [0], [1], [0, 0, 1, 1], [], []>} : vector<32x32xf32>, vector<32x256xf32>, vector<32x256xf32> -> vector<32x256xf32>
    %c2_i32_62 = arith.constant 2 : i32
    %179 = tpu.dynamic_rotate %178 by %c2_i32_62 dim 0 : vector<32x256xf32>, i32 -> vector<32x256xf32>
    %c30_i32_63 = arith.constant 30 : i32
    %180 = tpu.dynamic_rotate %178 by %c30_i32_63 dim 0 : vector<32x256xf32>, i32 -> vector<32x256xf32>
    %c2_i32_64 = arith.constant 2 : i32
    %181 = vector.broadcast %c2_i32_64 : i32 to vector<32x256xi32>
    %182 = arith.andi %2, %181 : vector<32x256xi32>
    %c0_i32_65 = arith.constant 0 : i32
    %183 = vector.broadcast %c0_i32_65 : i32 to vector<32x256xi32>
    %184 = arith.cmpi ne, %182, %183 : vector<32x256xi32>
    %185 = arith.mulf %26, %178 : vector<32x256xf32>
    %186 = arith.mulf %29, %179 : vector<32x256xf32>
    %187 = arith.addf %185, %186 : vector<32x256xf32>
    %188 = arith.mulf %29, %180 : vector<32x256xf32>
    %189 = arith.subf %185, %188 : vector<32x256xf32>
    %190 = arith.select %184, %187, %189 : vector<32x256xi1>, vector<32x256xf32>
    %c9 = arith.constant 9 : index
    %c0_66 = arith.constant 0 : index
    %c0_67 = arith.constant 0 : index
    %191 = vector.load %arg2[%c9, %c0_66, %c0_67] : memref<12x32x32xf32, #tpu.memory_space<vmem>>, vector<1x32x32xf32>
    %192 = vector.shape_cast %191 : vector<1x32x32xf32> to vector<32x32xf32>
    %cst_68 = arith.constant dense<0.000000e+00> : vector<32x256xf32>
    %193 = tpu.matmul %192, %190, %cst_68 {dimension_numbers = #tpu.dot_dimension_numbers<[1], [0], [0], [1], [0, 0, 1, 1], [], []>} : vector<32x32xf32>, vector<32x256xf32>, vector<32x256xf32> -> vector<32x256xf32>
    %c4_i32_69 = arith.constant 4 : i32
    %194 = tpu.dynamic_rotate %193 by %c4_i32_69 dim 0 : vector<32x256xf32>, i32 -> vector<32x256xf32>
    %c28_i32_70 = arith.constant 28 : i32
    %195 = tpu.dynamic_rotate %193 by %c28_i32_70 dim 0 : vector<32x256xf32>, i32 -> vector<32x256xf32>
    %c4_i32_71 = arith.constant 4 : i32
    %196 = vector.broadcast %c4_i32_71 : i32 to vector<32x256xi32>
    %197 = arith.andi %2, %196 : vector<32x256xi32>
    %c0_i32_72 = arith.constant 0 : i32
    %198 = vector.broadcast %c0_i32_72 : i32 to vector<32x256xi32>
    %199 = arith.cmpi ne, %197, %198 : vector<32x256xi32>
    %200 = arith.mulf %17, %193 : vector<32x256xf32>
    %201 = arith.mulf %20, %194 : vector<32x256xf32>
    %202 = arith.addf %200, %201 : vector<32x256xf32>
    %203 = arith.mulf %20, %195 : vector<32x256xf32>
    %204 = arith.subf %200, %203 : vector<32x256xf32>
    %205 = arith.select %199, %202, %204 : vector<32x256xi1>, vector<32x256xf32>
    %c10 = arith.constant 10 : index
    %c0_73 = arith.constant 0 : index
    %c0_74 = arith.constant 0 : index
    %206 = vector.load %arg2[%c10, %c0_73, %c0_74] : memref<12x32x32xf32, #tpu.memory_space<vmem>>, vector<1x32x32xf32>
    %207 = vector.shape_cast %206 : vector<1x32x32xf32> to vector<32x32xf32>
    %cst_75 = arith.constant dense<0.000000e+00> : vector<32x256xf32>
    %208 = tpu.matmul %207, %205, %cst_75 {dimension_numbers = #tpu.dot_dimension_numbers<[1], [0], [0], [1], [0, 0, 1, 1], [], []>} : vector<32x32xf32>, vector<32x256xf32>, vector<32x256xf32> -> vector<32x256xf32>
    %c1_i32_76 = arith.constant 1 : i32
    %209 = tpu.dynamic_rotate %208 by %c1_i32_76 dim 0 : vector<32x256xf32>, i32 -> vector<32x256xf32>
    %c31_i32_77 = arith.constant 31 : i32
    %210 = tpu.dynamic_rotate %208 by %c31_i32_77 dim 0 : vector<32x256xf32>, i32 -> vector<32x256xf32>
    %c1_i32_78 = arith.constant 1 : i32
    %211 = vector.broadcast %c1_i32_78 : i32 to vector<32x256xi32>
    %212 = arith.andi %2, %211 : vector<32x256xi32>
    %c0_i32_79 = arith.constant 0 : i32
    %213 = vector.broadcast %c0_i32_79 : i32 to vector<32x256xi32>
    %214 = arith.cmpi ne, %212, %213 : vector<32x256xi32>
    %215 = arith.mulf %35, %208 : vector<32x256xf32>
    %216 = arith.mulf %38, %209 : vector<32x256xf32>
    %217 = arith.addf %215, %216 : vector<32x256xf32>
    %218 = arith.mulf %38, %210 : vector<32x256xf32>
    %219 = arith.subf %215, %218 : vector<32x256xf32>
    %220 = arith.select %214, %217, %219 : vector<32x256xi1>, vector<32x256xf32>
    %c11 = arith.constant 11 : index
    %c0_80 = arith.constant 0 : index
    %c0_81 = arith.constant 0 : index
    %221 = vector.load %arg2[%c11, %c0_80, %c0_81] : memref<12x32x32xf32, #tpu.memory_space<vmem>>, vector<1x32x32xf32>
    %222 = vector.shape_cast %221 : vector<1x32x32xf32> to vector<32x32xf32>
    %cst_82 = arith.constant dense<0.000000e+00> : vector<32x256xf32>
    %223 = tpu.matmul %222, %220, %cst_82 {dimension_numbers = #tpu.dot_dimension_numbers<[1], [0], [0], [1], [0, 0, 1, 1], [], []>} : vector<32x32xf32>, vector<32x256xf32>, vector<32x256xf32> -> vector<32x256xf32>
    %224 = vector.extract_strided_slice %223 {offsets = [0, 0], sizes = [16, 128], strides = [1, 1]} : vector<32x256xf32> to vector<16x128xf32>
    %225 = vector.extract_strided_slice %223 {offsets = [16, 0], sizes = [16, 128], strides = [1, 1]} : vector<32x256xf32> to vector<16x128xf32>
    %226 = vector.extract_strided_slice %223 {offsets = [0, 128], sizes = [16, 128], strides = [1, 1]} : vector<32x256xf32> to vector<16x128xf32>
    %227 = vector.extract_strided_slice %223 {offsets = [16, 128], sizes = [16, 128], strides = [1, 1]} : vector<32x256xf32> to vector<16x128xf32>
    %228 = arith.mulf %226, %224 : vector<16x128xf32>
    %229 = arith.mulf %227, %225 : vector<16x128xf32>
    %230 = arith.addf %228, %229 : vector<16x128xf32>
    %cst_83 = arith.constant dense<0.000000e+00> : vector<128xf32>
    %231 = vector.multi_reduction <add>, %230, %cst_83 [0] : vector<16x128xf32> to vector<128xf32>
    %232 = vector.shape_cast %231 : vector<128xf32> to vector<1x128xf32>
    %233 = arith.mulf %226, %225 : vector<16x128xf32>
    %234 = arith.mulf %227, %224 : vector<16x128xf32>
    %235 = arith.subf %233, %234 : vector<16x128xf32>
    %cst_84 = arith.constant dense<0.000000e+00> : vector<128xf32>
    %236 = vector.multi_reduction <add>, %235, %cst_84 [0] : vector<16x128xf32> to vector<128xf32>
    %237 = vector.shape_cast %236 : vector<128xf32> to vector<1x128xf32>
    %238 = arith.mulf %232, %232 : vector<1x128xf32>
    %239 = arith.mulf %237, %237 : vector<1x128xf32>
    %240 = arith.addf %238, %239 : vector<1x128xf32>
    %c0_85 = arith.constant 0 : index
    %c0_86 = arith.constant 0 : index
    %241 = vector.load %arg3[%c0_85, %c0_86] : memref<1x128xf32, #tpu.memory_space<vmem>>, vector<1x128xf32>
    tpu.vector_store %arg3[%c0_85, %c0_86], %240 {strides = array<i32>} : memref<1x128xf32, #tpu.memory_space<vmem>>, vector<1x128xf32>,
    return
  }
  func.func @transform_0(%arg0: i32) -> (i32, i32, i32) {
    %c0_i32 = arith.constant 0 : i32
    %c0_i32_0 = arith.constant 0 : i32
    %c0_i32_1 = arith.constant 0 : i32
    return %arg0, %c0_i32, %c0_i32_0 : i32, i32, i32
  }
  func.func @transform_1(%arg0: i32) -> (i32, i32, i32) {
    %c0_i32 = arith.constant 0 : i32
    %c0_i32_0 = arith.constant 0 : i32
    %c0_i32_1 = arith.constant 0 : i32
    %c0_i32_2 = arith.constant 0 : i32
    return %c0_i32, %c0_i32_0, %c0_i32_1 : i32, i32, i32
  }
  func.func @transform_2(%arg0: i32) -> (i32, i32) {
    %c0_i32 = arith.constant 0 : i32
    %c0_i32_0 = arith.constant 0 : i32
    return %c0_i32, %arg0 : i32, i32
  }
}

</mosaic_0001>

<llo_original>
// kernel: qnet_forward.1
$region0: #{qnet_forward.1}
  #allocation0 [shape = 'u32[]', space=smem, size = 0x4, offset = 0x4, fixed_abs, tag = 'smem constant byte address 0x4 - core index']
  #allocation1 [shape = 'u32[144,128]{1,0:T(1,128)}', space=vmem, size = 0x12000, scoped, tag = 'internal scratch']
  %s0 = inlined_call_operand.vmem [shape: f32[1,4,256], index: 0, kind: input, shape index: {}]
  %s1 = inlined_call_operand.vmem [shape: f32[12,32,32], index: 1, kind: input, shape index: {}]
  %s2 = inlined_call_operand.vmem [shape: f32[1,128], index: 2, kind: output, shape index: {}]
  %s3 = sld [smem:[#allocation0]]
  $region18: #{qnet_forward.1} parent=0
    _
  %s5 = ssub.s32 1, %s3
  %s6 = scalar_select 0, %s5, %s3
  // Predicated region
  $region2: #{qnet_forward.1} parent=0 // pred_check
    _
  $region3: #{qnet_forward.1} parent=0 // pred_check_branch
    %8 = sbr.rel (0) target = $region5
  $region4: #{qnet_forward.1} parent=0 // pred_region
    _
  $region5: #{qnet_forward.1} parent=0 // pred_fallthru
    _
  // Predicated region
  $region6: #{qnet_forward.1} parent=0 // pred_check
    _
  $region7: #{qnet_forward.1} parent=0 // pred_check_branch
    %10 = sbr.rel (0) target = $region9
  $region8: #{qnet_forward.1} parent=0 // pred_region
    _
  $region9: #{qnet_forward.1} parent=0 // pred_fallthru
    _
  %v11 = vld [vmem:[%s0] sm:$0xff]
  %v12 = vlaneseq
  %v13 = vshrl.u32 %v12, 7
  %v14 = vadd.s32 %v13, 8
  %v15 = vadd.s32 %v13, 16
  %v16 = vadd.s32 %v13, 24
  %v17 = vmul.f32 %v11, 0.5
  %v18 = vand.u32 2147483647, %v17
  %vm19 = vcmp.le.f32.partialorder %v18, 0.7853982
  %vm20 = vcmp.lt.s32.totalorder %v17, 0
  %v21 = vand.u32 %v17, 2139095040
  %v22 = vshrl.u32 %v21, 23
  %v23 = vsub.s32 %v22, 127
  %v24 = vand.u32 2147483647, %v17
  %v25 = vand.u32 %v24, 8388607
  %v26 = vor.u32 %v25, 8388608
  %v27 = vsub.s32 0, %v26
  %v28 = vadd.s32 %v23, 1
  %vm29 = vcmp.gt.s32.totalorder %v28, 0
  %v30 = vsel %vm29, %v28, 0
  %v31 = vshrl.u32 %v30, 5
  %v32 = vand.u32 %v30, 31
  %v33 = vsub.s32 32, %v32
  %v34 = vshrl.u32 683565275, %v33
  %v35 = vshll.u32 683565275, %v32
  %v36 = vshrl.u32 2475754826, %v33
  %v37 = vor.u32 %v35, %v36
  %v38 = vshll.u32 2475754826, %v32
  %v39 = vshrl.u32 2131351028, %v33
  %v40 = vor.u32 %v38, %v39
  %v41 = vshll.u32 2131351028, %v32
  %v42 = vshrl.u32 2102212464, %v33
  %v43 = vor.u32 %v41, %v42
  %v44 = vshll.u32 2102212464, %v32
  %v45 = vshrl.u32 920167782, %v33
  %v46 = vor.u32 %v44, %v45
  %v47 = vshll.u32 920167782, %v32
  %v48 = vshrl.u32 1326507024, %v33
  %v49 = vor.u32 %v47, %v48
  %vm50 = vcmp.lt.s32.totalorder %v31, 1
  %vm51 = vcmp.lt.s32.totalorder %v31, 2
  %vm52 = vcmp.lt.s32.totalorder %v31, 3
  %vm53 = vcmp.lt.s32.totalorder %v31, 4
  %v54 = vsel %vm50, %v34, %v37
  %v55 = vsel %vm53, %v43, 2102212464
  %v56 = vsel %vm52, %v40, %v55
  %v57 = vsel %vm51, %v54, %v56
  %v58 = vsel %vm50, %v37, %v40
  %v59 = vsel %vm53, %v46, 920167782
  %v60 = vsel %vm52, %v43, %v59
  %v61 = vsel %vm51, %v58, %v60
  %v62 = vsel %vm50, %v40, %v43
  %v63 = vsel %vm53, %v49, 1326507024
  %v64 = vsel %vm52, %v46, %v63
  %v65 = vsel %vm51, %v62, %v64
  %v66 = vshll.u32 %v26, 8
  %v67 = vmul.u32.u64.compose %v66, %v65
  %v68 = vextract.low.u32 %v67
  %v69 = vextract.high.u32 %v67
  %v70 = vmul.u32.u64.compose %v66, %v61
  %v71 = vextract.low.u32 %v70
  %v72 = vextract.high.u32 %v70
  %v73 = vmul.u32 %v66, %v57
  %v74 = vadd.s32 %v69, %v71
  %vm75 = vc.u32 %v69, %v71
  %v76 = vadd.s32 %v72, 1
  %v77 = vsel %vm75, %v76, %v72
  %v78 = vadd.s32 %v73, %v77
  %v79 = vadd.s32 %v78, 536870912
  %v80 = vshrl.u32 %v79, 30
  %v81 = vshll.u32 %v80, 30
  %v82 = vsub.s32 %v78, %v81
  %vm83 = vcmp.lt.s32.totalorder %v82, 0
  %v84 = vsub.s32 0, %v82
  %v85 = vsel %vm83, %v84, %v82
  %v86 = vclz %v85
  %v87 = vsub.s32 %v86, 2
  %vm88 = vcmp.gt.s32.totalorder 0, %v87
  %v89 = vsel %vm88, 0, %v87
  %v90 = vsub.s32 32, %v89
  %v91 = vshll.u32 %v82, %v89
  %v92 = vshrl.u32 %v74, %v90
  %v93 = vor.u32 %v91, %v92
  %v94 = vsub.s32 4294967266, %v89
  %v95 = vadd.s32 %v94, 127
  %v96 = vshll.u32 %v95, 23
  %v97 = vor.u32 4788187, %v96
  %v98 = vand.u32 2147483647, %v97
  %v100 = vcvt.s32.f32 %v93
  %v101 = vmul.f32 %v100, %v98
  %v102 = vxor.u32 %v101, 2147483648
  %v103 = vsel %vm20, %v102, %v101
  %v104 = vsub.s32 4, %v80
  %v105 = vsel %vm20, %v104, %v80
  %v106 = vsel %vm19, %v17, %v103
  %v107 = vsel %vm19, 0, %v105
  %v108 = vcosq.f32.pop %v106
  %v109 = vsinq.f32.pop %v106
  %vm110 = vweird.f32 %v17
  %v111 = vand.u32 %v107, 3
  %vm112 = vcmp.lt.s32.totalorder %v111, 2
  %vm113 = vcmp.eq.s32.totalorder %v111, 0
  %v114 = vxor.u32 %v109, 2147483648
  %v115 = vsel %vm113, %v108, %v114
  %vm116 = vcmp.eq.s32.totalorder %v111, 2
  %v117 = vxor.u32 %v108, 2147483648
  %v118 = vsel %vm116, %v117, %v109
  %v119 = vsel %vm112, %v115, %v118
  %v120 = vsel %vm110, nan, %v119
  %v122 = vlaneseq
  %v123 = vshrl.u32 %v122, 7
  %v124 = vsub.s32 0, %v123
  %v125 = vrot.slane %v120, %v124
  %v126 = vlaneseq
  %v127 = vshrl.u32 %v126, 7
  %v128 = vsub.s32 4, %v127
  %v129 = vrot.slane %v120, %v128
  %v132 = vlaneseq
  %v133 = vshrl.u32 %v132, 7
  %v134 = vsub.s32 0, %v133
  %v135 = vrot.slane %v125, %v134
  %v136 = vlaneseq
  %v137 = vshrl.u32 %v136, 7
  %v138 = vsub.s32 0, %v137
  %v139 = vrot.slane %v129, %v138
  %v140 = vand.u32 2147483647, %v17
  %vm141 = vcmp.le.f32.partialorder %v140, 0.7853982
  %vm142 = vcmp.lt.s32.totalorder %v17, 0
  %v143 = vand.u32 %v17, 2139095040
  %v144 = vshrl.u32 %v143, 23
  %v145 = vsub.s32 %v144, 127
  %v146 = vand.u32 2147483647, %v17
  %v147 = vand.u32 %v146, 8388607
  %v148 = vor.u32 %v147, 8388608
  %v149 = vsub.s32 0, %v148
  %v150 = vadd.s32 %v145, 1
  %vm151 = vcmp.gt.s32.totalorder %v150, 0
  %v152 = vsel %vm151, %v150, 0
  %v153 = vshrl.u32 %v152, 5
  %v154 = vand.u32 %v152, 31
  %v155 = vsub.s32 32, %v154
  %v156 = vshrl.u32 683565275, %v155
  %v157 = vshll.u32 683565275, %v154
  %v158 = vshrl.u32 2475754826, %v155
  %v159 = vor.u32 %v157, %v158
  %v160 = vshll.u32 2475754826, %v154
  %v161 = vshrl.u32 2131351028, %v155
  %v162 = vor.u32 %v160, %v161
  %v163 = vshll.u32 2131351028, %v154
  %v164 = vshrl.u32 2102212464, %v155
  %v165 = vor.u32 %v163, %v164
  %v166 = vshll.u32 2102212464, %v154
  %v167 = vshrl.u32 920167782, %v155
  %v168 = vor.u32 %v166, %v167
  %v169 = vshll.u32 920167782, %v154
  %v170 = vshrl.u32 1326507024, %v155
  %v171 = vor.u32 %v169, %v170
  %vm172 = vcmp.lt.s32.totalorder %v153, 1
  %vm173 = vcmp.lt.s32.totalorder %v153, 2
  %vm174 = vcmp.lt.s32.totalorder %v153, 3
  %vm175 = vcmp.lt.s32.totalorder %v153, 4
  %v176 = vsel %vm172, %v156, %v159
  %v177 = vsel %vm175, %v165, 2102212464
  %v178 = vsel %vm174, %v162, %v177
  %v179 = vsel %vm173, %v176, %v178
  %v180 = vsel %vm172, %v159, %v162
  %v181 = vsel %vm175, %v168, 920167782
  %v182 = vsel %vm174, %v165, %v181
  %v183 = vsel %vm173, %v180, %v182
  %v184 = vsel %vm172, %v162, %v165
  %v185 = vsel %vm175, %v171, 1326507024
  %v186 = vsel %vm174, %v168, %v185
  %v187 = vsel %vm173, %v184, %v186
  %v188 = vshll.u32 %v148, 8
  %v189 = vmul.u32.u64.compose %v188, %v187
  %v190 = vextract.low.u32 %v189
  %v191 = vextract.high.u32 %v189
  %v192 = vmul.u32.u64.compose %v188, %v183
  %v193 = vextract.low.u32 %v192
  %v194 = vextract.high.u32 %v192
  %v195 = vmul.u32 %v188, %v179
  %v196 = vadd.s32 %v191, %v193
  %vm197 = vc.u32 %v191, %v193
  %v198 = vadd.s32 %v194, 1
  %v199 = vsel %vm197, %v198, %v194
  %v200 = vadd.s32 %v195, %v199
  %v201 = vadd.s32 %v200, 536870912
  %v202 = vshrl.u32 %v201, 30
  %v203 = vshll.u32 %v202, 30
  %v204 = vsub.s32 %v200, %v203
  %vm205 = vcmp.lt.s32.totalorder %v204, 0
  %v206 = vsub.s32 0, %v204
  %v207 = vsel %vm205, %v206, %v204
  %v208 = vclz %v207
  %v209 = vsub.s32 %v208, 2
  %vm210 = vcmp.gt.s32.totalorder 0, %v209
  %v211 = vsel %vm210, 0, %v209
  %v212 = vsub.s32 32, %v211
  %v213 = vshll.u32 %v204, %v211
  %v214 = vshrl.u32 %v196, %v212
  %v215 = vor.u32 %v213, %v214
  %v216 = vsub.s32 4294967266, %v211
  %v217 = vadd.s32 %v216, 127
  %v218 = vshll.u32 %v217, 23
  %v219 = vor.u32 4788187, %v218
  %v220 = vand.u32 2147483647, %v219
  %v222 = vcvt.s32.f32 %v215
  %v223 = vmul.f32 %v222, %v220
  %v224 = vxor.u32 %v223, 2147483648
  %v225 = vsel %vm142, %v224, %v223
  %v226 = vsub.s32 4, %v202
  %v227 = vsel %vm142, %v226, %v202
  %v228 = vsel %vm141, %v17, %v225
  %v229 = vsel %vm141, 0, %v227
  %v230 = vcosq.f32.pop %v228
  %v231 = vsinq.f32.pop %v228
  %vm232 = vweird.f32 %v17
  %v233 = vadd.s32 %v229, 3
  %v234 = vand.u32 %v233, 3
  %vm235 = vcmp.lt.s32.totalorder %v234, 2
  %vm236 = vcmp.eq.s32.totalorder %v234, 0
  %v237 = vxor.u32 %v231, 2147483648
  %v238 = vsel %vm236, %v230, %v237
  %vm239 = vcmp.eq.s32.totalorder %v234, 2
  %v240 = vxor.u32 %v230, 2147483648
  %v241 = vsel %vm239, %v240, %v231
  %v242 = vsel %vm235, %v238, %v241
  %v243 = vsel %vm232, nan, %v242
  %v245 = vlaneseq
  %v246 = vshrl.u32 %v245, 7
  %v247 = vsub.s32 0, %v246
  %v248 = vrot.slane %v243, %v247
  %v249 = vlaneseq
  %v250 = vshrl.u32 %v249, 7
  %v251 = vsub.s32 4, %v250
  %v252 = vrot.slane %v243, %v251
  %v255 = vlaneseq
  %v256 = vshrl.u32 %v255, 7
  %v257 = vsub.s32 0, %v256
  %v258 = vrot.slane %v248, %v257
  %v259 = vlaneseq
  %v260 = vshrl.u32 %v259, 7
  %v261 = vsub.s32 0, %v260
  %v262 = vrot.slane %v252, %v261
  %v263 = vlaneseq
  %v264 = vshrl.u32 %v263, 7
  %v265 = vsub.s32 1, %v264
  %v266 = vrot.slane %v120, %v265
  %v267 = vlaneseq
  %v268 = vshrl.u32 %v267, 7
  %v269 = vsub.s32 5, %v268
  %v270 = vrot.slane %v120, %v269
  %v273 = vlaneseq
  %v274 = vshrl.u32 %v273, 7
  %v275 = vsub.s32 1, %v274
  %v276 = vrot.slane %v266, %v275
  %v277 = vlaneseq
  %v278 = vshrl.u32 %v277, 7
  %v279 = vsub.s32 1, %v278
  %v280 = vrot.slane %v270, %v279
  %v281 = vlaneseq
  %v282 = vshrl.u32 %v281, 7
  %v283 = vsub.s32 1, %v282
  %v284 = vrot.slane %v243, %v283
  %v285 = vlaneseq
  %v286 = vshrl.u32 %v285, 7
  %v287 = vsub.s32 5, %v286
  %v288 = vrot.slane %v243, %v287
  %v291 = vlaneseq
  %v292 = vshrl.u32 %v291, 7
  %v293 = vsub.s32 1, %v292
  %v294 = vrot.slane %v284, %v293
  %v295 = vlaneseq
  %v296 = vshrl.u32 %v295, 7
  %v297 = vsub.s32 1, %v296
  %v298 = vrot.slane %v288, %v297
  %v299 = vlaneseq
  %v300 = vshrl.u32 %v299, 7
  %v301 = vsub.s32 2, %v300
  %v302 = vrot.slane %v120, %v301
  %v303 = vlaneseq
  %v304 = vshrl.u32 %v303, 7
  %v305 = vsub.s32 6, %v304
  %v306 = vrot.slane %v120, %v305
  %v309 = vlaneseq
  %v310 = vshrl.u32 %v309, 7
  %v311 = vsub.s32 2, %v310
  %v312 = vrot.slane %v302, %v311
  %v313 = vlaneseq
  %v314 = vshrl.u32 %v313, 7
  %v315 = vsub.s32 2, %v314
  %v316 = vrot.slane %v306, %v315
  %v317 = vlaneseq
  %v318 = vshrl.u32 %v317, 7
  %v319 = vsub.s32 2, %v318
  %v320 = vrot.slane %v243, %v319
  %v321 = vlaneseq
  %v322 = vshrl.u32 %v321, 7
  %v323 = vsub.s32 6, %v322
  %v324 = vrot.slane %v243, %v323
  %v327 = vlaneseq
  %v328 = vshrl.u32 %v327, 7
  %v329 = vsub.s32 2, %v328
  %v330 = vrot.slane %v320, %v329
  %v331 = vlaneseq
  %v332 = vshrl.u32 %v331, 7
  %v333 = vsub.s32 2, %v332
  %v334 = vrot.slane %v324, %v333
  %v335 = vlaneseq
  %v336 = vshrl.u32 %v335, 7
  %v337 = vsub.s32 3, %v336
  %v338 = vrot.slane %v120, %v337
  %v339 = vlaneseq
  %v340 = vshrl.u32 %v339, 7
  %v341 = vsub.s32 7, %v340
  %v342 = vrot.slane %v120, %v341
  %v345 = vlaneseq
  %v346 = vshrl.u32 %v345, 7
  %v347 = vsub.s32 3, %v346
  %v348 = vrot.slane %v338, %v347
  %v349 = vlaneseq
  %v350 = vshrl.u32 %v349, 7
  %v351 = vsub.s32 3, %v350
  %v352 = vrot.slane %v342, %v351
  %v353 = vlaneseq
  %v354 = vshrl.u32 %v353, 7
  %v355 = vsub.s32 3, %v354
  %v356 = vrot.slane %v243, %v355
  %v357 = vlaneseq
  %v358 = vshrl.u32 %v357, 7
  %v359 = vsub.s32 7, %v358
  %v360 = vrot.slane %v243, %v359
  %v363 = vlaneseq
  %v364 = vshrl.u32 %v363, 7
  %v365 = vsub.s32 3, %v364
  %v366 = vrot.slane %v356, %v365
  %v367 = vlaneseq
  %v368 = vshrl.u32 %v367, 7
  %v369 = vsub.s32 3, %v368
  %v370 = vrot.slane %v360, %v369
  %vm371 = vcmp.lt.s32.totalorder %v13, 16
  %vm372 = vcmp.lt.s32.totalorder %v14, 16
  %vm373 = vcmp.lt.s32.totalorder %v15, 16
  %vm374 = vcmp.lt.s32.totalorder %v16, 16
  %v375 = vsel %vm371, 0.25, 0.0
  %v376 = vsel %vm372, 0.25, 0.0
  %v377 = vsel %vm373, 0.25, 0.0
  %v378 = vsel %vm374, 0.25, 0.0
  %v379 = vand.u32 %v13, 8
  %v380 = vand.u32 %v14, 8
  %v381 = vand.u32 %v15, 8
  %v382 = vand.u32 %v16, 8
  %vm383 = vcmp.ne.s32.totalorder %v379, 0
  %vm384 = vcmp.ne.s32.totalorder %v380, 0
  %vm385 = vcmp.ne.s32.totalorder %v381, 0
  %vm386 = vcmp.ne.s32.totalorder %v382, 0
  %v387 = vmul.f32 %v135, %v375
  %v388 = vmul.f32 %v139, %v375
  %v389 = vmul.f32 %v135, %v376
  %v390 = vmul.f32 %v139, %v376
  %v391 = vmul.f32 %v135, %v377
  %v392 = vmul.f32 %v139, %v377
  %v393 = vmul.f32 %v135, %v378
  %v394 = vmul.f32 %v139, %v378
  %v395 = vmul.f32 %v258, %v378
  %v396 = vmul.f32 %v262, %v378
  %v397 = vmul.f32 %v258, %v375
  %v398 = vmul.f32 %v262, %v375
  %v399 = vmul.f32 %v258, %v376
  %v400 = vmul.f32 %v262, %v376
  %v401 = vmul.f32 %v258, %v377
  %v402 = vmul.f32 %v262, %v377
  %v403 = vadd.f32 %v387, %v395
  %v404 = vadd.f32 %v388, %v396
  %v405 = vadd.f32 %v389, %v397
  %v406 = vadd.f32 %v390, %v398
  %v407 = vadd.f32 %v391, %v399
  %v408 = vadd.f32 %v392, %v400
  %v409 = vadd.f32 %v393, %v401
  %v410 = vadd.f32 %v394, %v402
  %v411 = vsub.f32 %v387, %v399
  %v412 = vsub.f32 %v388, %v400
  %v413 = vsub.f32 %v389, %v401
  %v414 = vsub.f32 %v390, %v402
  %v415 = vsub.f32 %v391, %v395
  %v416 = vsub.f32 %v392, %v396
  %v417 = vsub.f32 %v393, %v397
  %v418 = vsub.f32 %v394, %v398
  %v419 = vsel %vm383, %v403, %v411
  %v420 = vsel %vm383, %v404, %v412
  %v421 = vsel %vm384, %v405, %v413
  %v422 = vsel %vm384, %v406, %v414
  %v423 = vsel %vm385, %v407, %v415
  %v424 = vsel %vm385, %v408, %v416
  %v425 = vsel %vm386, %v409, %v417
  %v426 = vsel %vm386, %v410, %v418
  %v427 = vld [vmem:[%s1] sm:$0xff]
  %v428 = vld [vmem:[%s1 + $0x8] sm:$0xff]
  %v429 = vld [vmem:[%s1 + $0x10] sm:$0xff]
  %v430 = vld [vmem:[%s1 + $0x18] sm:$0xff]
  %vm431 = vcmask 261120
  %v433 = vsel %vm431, %v427, 0
  %v436 = vsel %vm431, %v428, 0
  %v439 = vsel %vm431, %v429, 0
  %v442 = vsel %vm431, %v430, 0
  %444 = vmatprep.subr.mxu0 %v420
  %445 = vmatpush1.msra.mxu0 %v419
  %446 = vmatprep.subr.mxu0 %v422
  %447 = vmatpush1.msra.mxu0 %v421
  %448 = vmatprep.subr.mxu0 %v424
  %449 = vmatpush1.msra.mxu0 %v423
  %450 = vmatprep.subr.mxu0 %v426
  %451 = vmatpush1.msra.mxu0 %v425
  %452 = vmatprep.subr.mxu0 0.0
  %453 = vmatpush1.msra.mxu0 0.0
  %454 = vmatprep.subr.mxu0 0.0
  %455 = vmatpush1.msra.mxu0 0.0
  %456 = vmatprep.subr.mxu0 0.0
  %457 = vmatpush1.msra.mxu0 0.0
  %458 = vmatprep.subr.mxu0 0.0
  %459 = vmatpush1.msra.mxu0 0.0
  %460 = vmatprep.subr.mxu0 0.0
  %461 = vmatpush1.msra.mxu0 0.0
  %462 = vmatprep.subr.mxu0 0.0
  %463 = vmatpush1.msra.mxu0 0.0
  %464 = vmatprep.subr.mxu0 0.0
  %465 = vmatpush1.msra.mxu0 0.0
  %466 = vmatprep.subr.mxu0 0.0
  %467 = vmatpush1.msra.mxu0 0.0
  %468 = vmatprep.subr.mxu0 0.0
  %469 = vmatpush1.msra.mxu0 0.0
  %470 = vmatprep.subr.mxu0 0.0
  %471 = vmatpush1.msra.mxu0 0.0
  %472 = vmatprep.subr.mxu0 0.0
  %473 = vmatpush1.msra.mxu0 0.0
  %474 = vmatprep.subr.mxu0 0.0
  %475 = vmatpush1.msra.mxu0 0.0
  %476 = vmatprep.subr.mxu0 0.0
  %477 = vmatpush1.msra.mxu0 0.0
  %478 = vmatprep.subr.mxu0 0.0
  %479 = vmatpush1.msra.mxu0 0.0
  %480 = vmatprep.subr.mxu0 0.0
  %481 = vmatpush1.msra.mxu0 0.0
  %482 = vmatprep.subr.mxu0 0.0
  %483 = vmatpush1.msra.mxu0 0.0
  %484 = vmatprep.subr.mxu0 0.0
  %485 = vmatpush1.msra.mxu0 0.0
  %486 = vmatprep.subr.mxu0 0.0
  %487 = vmatpush1.msra.mxu0 0.0
  %488 = vmatprep.subr.mxu0 0.0
  %489 = vmatpush1.msra.mxu0 0.0
  %490 = vmatprep.subr.mxu0 0.0
  %491 = vmatpush1.msra.mxu0 0.0
  %492 = vmatprep.subr.mxu0 0.0
  %493 = vmatpush1.msra.mxu0 0.0
  %494 = vmatprep.subr.mxu0 0.0
  %495 = vmatpush1.msra.mxu0 0.0
  %496 = vmatprep.subr.mxu0 0.0
  %497 = vmatpush1.msra.mxu0 0.0
  %498 = vmatprep.subr.mxu0 0.0
  %499 = vmatpush1.msra.mxu0 0.0
  %500 = vmatprep.subr.mxu0 0.0
  %501 = vmatpush1.msra.mxu0 0.0
  %502 = vmatprep.subr.mxu0 0.0
  %503 = vmatpush1.msra.mxu0 0.0
  %504 = vmatprep.subr.mxu0 0.0
  %505 = vmatpush1.msra.mxu0 0.0
  %506 = vmatprep.subr.mxu0 0.0
  %507 = vmatpush1.msra.mxu0 0.0
  %508 = vmatprep.mubr.f32.mxu0 0.0
  %509 = vmatmul.mubr.f32.gmra.mrb[0].mxu0 %v433
  %v510 = vpop.f32.mrb[0].mxu0
  %v511 = vadd.f32 0.0, %v510
  %v512 = vpop.f32.mrb[0].mxu0
  %v513 = vadd.f32 0.0, %v512
  %514 = vmatprep.mubr.f32.mxu0 0.0
  %515 = vmatmul.mubr.f32.gmra.mrb[0].mxu0 %v436
  %v516 = vpop.f32.mrb[0].mxu0
  %v517 = vadd.f32 0.0, %v516
  %v518 = vpop.f32.mrb[0].mxu0
  %v519 = vadd.f32 0.0, %v518
  %520 = vmatprep.mubr.f32.mxu0 0.0
  %521 = vmatmul.mubr.f32.gmra.mrb[0].mxu0 %v439
  %v522 = vpop.f32.mrb[0].mxu0
  %v523 = vadd.f32 0.0, %v522
  %v524 = vpop.f32.mrb[0].mxu0
  %v525 = vadd.f32 0.0, %v524
  %526 = vmatprep.mubr.f32.mxu0 0.0
  %527 = vmatmul.mubr.f32.gmra.mrb[0].mxu0 %v442
  %v528 = vpop.f32.mrb[0].mxu0
  %v529 = vadd.f32 0.0, %v528
  %v530 = vpop.f32.mrb[0].mxu0
  %v531 = vadd.f32 0.0, %v530
  %532 = vdwg.mxu0
  %v533 = vrot.slane %v511, 6
  %v534 = vrot.slane %v513, 6
  %v535 = vrot.slane %v517, 6
  %v536 = vrot.slane %v519, 6
  %v537 = vrot.slane %v523, 6
  %v538 = vrot.slane %v525, 6
  %v539 = vrot.slane %v529, 6
  %v540 = vrot.slane %v531, 6
  %vm541 = vcmp.lt.s32.totalorder %v13, 2
  %v542 = vsel %vm541, %v537, %v539
  %v543 = vsel %vm541, %v538, %v540
  %v544 = vsel %vm541, %v535, %v537
  %v545 = vsel %vm541, %v536, %v538
  %v546 = vsel %vm541, %v533, %v535
  %v547 = vsel %vm541, %v534, %v536
  %v548 = vsel %vm541, %v539, %v533
  %v549 = vsel %vm541, %v540, %v534
  %v550 = vrot.slane %v511, 2
  %v551 = vrot.slane %v513, 2
  %v552 = vrot.slane %v517, 2
  %v553 = vrot.slane %v519, 2
  %v554 = vrot.slane %v523, 2
  %v555 = vrot.slane %v525, 2
  %v556 = vrot.slane %v529, 2
  %v557 = vrot.slane %v531, 2
  %vm558 = vcmp.lt.s32.totalorder %v13, 6
  %v559 = vsel %vm558, %v554, %v556
  %v560 = vsel %vm558, %v555, %v557
  %v561 = vsel %vm558, %v552, %v554
  %v562 = vsel %vm558, %v553, %v555
  %v563 = vsel %vm558, %v550, %v552
  %v564 = vsel %vm558, %v551, %v553
  %v565 = vsel %vm558, %v556, %v550
  %v566 = vsel %vm558, %v557, %v551
  %v567 = vand.u32 %v13, 2
  %v568 = vand.u32 %v14, 2
  %v569 = vand.u32 %v15, 2
  %v570 = vand.u32 %v16, 2
  %vm571 = vcmp.ne.s32.totalorder %v567, 0
  %vm572 = vcmp.ne.s32.totalorder %v568, 0
  %vm573 = vcmp.ne.s32.totalorder %v569, 0
  %vm574 = vcmp.ne.s32.totalorder %v570, 0
  %v575 = vmul.f32 %v312, %v511
  %v576 = vmul.f32 %v316, %v513
  %v577 = vmul.f32 %v312, %v517
  %v578 = vmul.f32 %v316, %v519
  %v579 = vmul.f32 %v312, %v523
  %v580 = vmul.f32 %v316, %v525
  %v581 = vmul.f32 %v312, %v529
  %v582 = vmul.f32 %v316, %v531
  %v583 = vmul.f32 %v330, %v548
  %v584 = vmul.f32 %v334, %v549
  %v585 = vmul.f32 %v330, %v546
  %v586 = vmul.f32 %v334, %v547
  %v587 = vmul.f32 %v330, %v544
  %v588 = vmul.f32 %v334, %v545
  %v589 = vmul.f32 %v330, %v542
  %v590 = vmul.f32 %v334, %v543
  %v591 = vadd.f32 %v575, %v583
  %v592 = vadd.f32 %v576, %v584
  %v593 = vadd.f32 %v577, %v585
  %v594 = vadd.f32 %v578, %v586
  %v595 = vadd.f32 %v579, %v587
  %v596 = vadd.f32 %v580, %v588
  %v597 = vadd.f32 %v581, %v589
  %v598 = vadd.f32 %v582, %v590
  %v599 = vmul.f32 %v330, %v563
  %v600 = vmul.f32 %v334, %v564
  %v601 = vmul.f32 %v330, %v561
  %v602 = vmul.f32 %v334, %v562
  %v603 = vmul.f32 %v330, %v559
  %v604 = vmul.f32 %v334, %v560
  %v605 = vmul.f32 %v330, %v565
  %v606 = vmul.f32 %v334, %v566
  %v607 = vsub.f32 %v575, %v599
  %v608 = vsub.f32 %v576, %v600
  %v609 = vsub.f32 %v577, %v601
  %v610 = vsub.f32 %v578, %v602
  %v611 = vsub.f32 %v579, %v603
  %v612 = vsub.f32 %v580, %v604
  %v613 = vsub.f32 %v581, %v605
  %v614 = vsub.f32 %v582, %v606
  %v615 = vsel %vm571, %v591, %v607
  %v616 = vsel %vm571, %v592, %v608
  %v617 = vsel %vm572, %v593, %v609
  %v618 = vsel %vm572, %v594, %v610
  %v619 = vsel %vm573, %v595, %v611
  %v620 = vsel %vm573, %v596, %v612
  %v621 = vsel %vm574, %v597, %v613
  %v622 = vsel %vm574, %v598, %v614
  %s623 = scalar_lea.vmem %s1, 32
  %v624 = vld [vmem:[%s623] sm:$0xff]
  %v625 = vld [vmem:[%s623 + $0x8] sm:$0xff]
  %v626 = vld [vmem:[%s623 + $0x10] sm:$0xff]
  %v627 = vld [vmem:[%s623 + $0x18] sm:$0xff]
  %v629 = vsel %vm431, %v624, 0
  %v632 = vsel %vm431, %v625, 0
  %v635 = vsel %vm431, %v626, 0
  %v638 = vsel %vm431, %v627, 0
  %640 = vmatprep.subr.mxu0 %v616
  %641 = vmatpush1.msra.mxu0 %v615
  %642 = vmatprep.subr.mxu0 %v618
  %643 = vmatpush1.msra.mxu0 %v617
  %644 = vmatprep.subr.mxu0 %v620
  %645 = vmatpush1.msra.mxu0 %v619
  %646 = vmatprep.subr.mxu0 %v622
  %647 = vmatpush1.msra.mxu0 %v621
  %648 = vmatprep.subr.mxu0 0.0
  %649 = vmatpush1.msra.mxu0 0.0
  %650 = vmatprep.subr.mxu0 0.0
  %651 = vmatpush1.msra.mxu0 0.0
  %652 = vmatprep.subr.mxu0 0.0
  %653 = vmatpush1.msra.mxu0 0.0
  %654 = vmatprep.subr.mxu0 0.0
  %655 = vmatpush1.msra.mxu0 0.0
  %656 = vmatprep.subr.mxu0 0.0
  %657 = vmatpush1.msra.mxu0 0.0
  %658 = vmatprep.subr.mxu0 0.0
  %659 = vmatpush1.msra.mxu0 0.0
  %660 = vmatprep.subr.mxu0 0.0
  %661 = vmatpush1.msra.mxu0 0.0
  %662 = vmatprep.subr.mxu0 0.0
  %663 = vmatpush1.msra.mxu0 0.0
  %664 = vmatprep.subr.mxu0 0.0
  %665 = vmatpush1.msra.mxu0 0.0
  %666 = vmatprep.subr.mxu0 0.0
  %667 = vmatpush1.msra.mxu0 0.0
  %668 = vmatprep.subr.mxu0 0.0
  %669 = vmatpush1.msra.mxu0 0.0
  %670 = vmatprep.subr.mxu0 0.0
  %671 = vmatpush1.msra.mxu0 0.0
  %672 = vmatprep.subr.mxu0 0.0
  %673 = vmatpush1.msra.mxu0 0.0
  %674 = vmatprep.subr.mxu0 0.0
  %675 = vmatpush1.msra.mxu0 0.0
  %676 = vmatprep.subr.mxu0 0.0
  %677 = vmatpush1.msra.mxu0 0.0
  %678 = vmatprep.subr.mxu0 0.0
  %679 = vmatpush1.msra.mxu0 0.0
  %680 = vmatprep.subr.mxu0 0.0
  %681 = vmatpush1.msra.mxu0 0.0
  %682 = vmatprep.subr.mxu0 0.0
  %683 = vmatpush1.msra.mxu0 0.0
  %684 = vmatprep.subr.mxu0 0.0
  %685 = vmatpush1.msra.mxu0 0.0
  %686 = vmatprep.subr.mxu0 0.0
  %687 = vmatpush1.msra.mxu0 0.0
  %688 = vmatprep.subr.mxu0 0.0
  %689 = vmatpush1.msra.mxu0 0.0
  %690 = vmatprep.subr.mxu0 0.0
  %691 = vmatpush1.msra.mxu0 0.0
  %692 = vmatprep.subr.mxu0 0.0
  %693 = vmatpush1.msra.mxu0 0.0
  %694 = vmatprep.subr.mxu0 0.0
  %695 = vmatpush1.msra.mxu0 0.0
  %696 = vmatprep.subr.mxu0 0.0
  %697 = vmatpush1.msra.mxu0 0.0
  %698 = vmatprep.subr.mxu0 0.0
  %699 = vmatpush1.msra.mxu0 0.0
  %700 = vmatprep.subr.mxu0 0.0
  %701 = vmatpush1.msra.mxu0 0.0
  %702 = vmatprep.subr.mxu0 0.0
  %703 = vmatpush1.msra.mxu0 0.0
  %704 = vmatprep.mubr.f32.mxu0 0.0
  %705 = vmatmul.mubr.f32.gmra.mrb[0].mxu0 %v629
  %v706 = vpop.f32.mrb[0].mxu0
  %v707 = vadd.f32 0.0, %v706
  %v708 = vpop.f32.mrb[0].mxu0
  %v709 = vadd.f32 0.0, %v708
  %710 = vmatprep.mubr.f32.mxu0 0.0
  %711 = vmatmul.mubr.f32.gmra.mrb[0].mxu0 %v632
  %v712 = vpop.f32.mrb[0].mxu0
  %v713 = vadd.f32 0.0, %v712
  %v714 = vpop.f32.mrb[0].mxu0
  %v715 = vadd.f32 0.0, %v714
  %716 = vmatprep.mubr.f32.mxu0 0.0
  %717 = vmatmul.mubr.f32.gmra.mrb[0].mxu0 %v635
  %v718 = vpop.f32.mrb[0].mxu0
  %v719 = vadd.f32 0.0, %v718
  %v720 = vpop.f32.mrb[0].mxu0
  %v721 = vadd.f32 0.0, %v720
  %722 = vmatprep.mubr.f32.mxu0 0.0
  %723 = vmatmul.mubr.f32.gmra.mrb[0].mxu0 %v638
  %v724 = vpop.f32.mrb[0].mxu0
  %v725 = vadd.f32 0.0, %v724
  %v726 = vpop.f32.mrb[0].mxu0
  %v727 = vadd.f32 0.0, %v726
  %728 = vdwg.mxu0
  %v729 = vrot.slane %v707, 4
  %v730 = vrot.slane %v709, 4
  %v731 = vrot.slane %v713, 4
  %v732 = vrot.slane %v715, 4
  %v733 = vrot.slane %v719, 4
  %v734 = vrot.slane %v721, 4
  %v735 = vrot.slane %v725, 4
  %v736 = vrot.slane %v727, 4
  %vm737 = vcmp.lt.s32.totalorder %v13, 4
  %v738 = vsel %vm737, %v733, %v735
  %v739 = vsel %vm737, %v734, %v736
  %v740 = vsel %vm737, %v731, %v733
  %v741 = vsel %vm737, %v732, %v734
  %v742 = vsel %vm737, %v729, %v731
  %v743 = vsel %vm737, %v730, %v732
  %v744 = vsel %vm737, %v735, %v729
  %v745 = vsel %vm737, %v736, %v730
  %v746 = vand.u32 %v13, 4
  %v747 = vand.u32 %v14, 4
  %v748 = vand.u32 %v15, 4
  %v749 = vand.u32 %v16, 4
  %vm750 = vcmp.ne.s32.totalorder %v746, 0
  %vm751 = vcmp.ne.s32.totalorder %v747, 0
  %vm752 = vcmp.ne.s32.totalorder %v748, 0
  %vm753 = vcmp.ne.s32.totalorder %v749, 0
  %v754 = vmul.f32 %v276, %v707
  %v755 = vmul.f32 %v280, %v709
  %v756 = vmul.f32 %v276, %v713
  %v757 = vmul.f32 %v280, %v715
  %v758 = vmul.f32 %v276, %v719
  %v759 = vmul.f32 %v280, %v721
  %v760 = vmul.f32 %v276, %v725
  %v761 = vmul.f32 %v280, %v727
  %v762 = vmul.f32 %v294, %v744
  %v763 = vmul.f32 %v298, %v745
  %v764 = vmul.f32 %v294, %v742
  %v765 = vmul.f32 %v298, %v743
  %v766 = vmul.f32 %v294, %v740
  %v767 = vmul.f32 %v298, %v741
  %v768 = vmul.f32 %v294, %v738
  %v769 = vmul.f32 %v298, %v739
  %v770 = vadd.f32 %v754, %v762
  %v771 = vadd.f32 %v755, %v763
  %v772 = vadd.f32 %v756, %v764
  %v773 = vadd.f32 %v757, %v765
  %v774 = vadd.f32 %v758, %v766
  %v775 = vadd.f32 %v759, %v767
  %v776 = vadd.f32 %v760, %v768
  %v777 = vadd.f32 %v761, %v769
  %v778 = vsub.f32 %v754, %v764
  %v779 = vsub.f32 %v755, %v765
  %v780 = vsub.f32 %v756, %v766
  %v781 = vsub.f32 %v757, %v767
  %v782 = vsub.f32 %v758, %v768
  %v783 = vsub.f32 %v759, %v769
  %v784 = vsub.f32 %v760, %v762
  %v785 = vsub.f32 %v761, %v763
  %v786 = vsel %vm750, %v770, %v778
  %v787 = vsel %vm750, %v771, %v779
  %v788 = vsel %vm751, %v772, %v780
  %v789 = vsel %vm751, %v773, %v781
  %v790 = vsel %vm752, %v774, %v782
  %v791 = vsel %vm752, %v775, %v783
  %v792 = vsel %vm753, %v776, %v784
  %v793 = vsel %vm753, %v777, %v785
  %s794 = scalar_lea.vmem %s1, 64
  %v795 = vld [vmem:[%s794] sm:$0xff]
  %v796 = vld [vmem:[%s794 + $0x8] sm:$0xff]
  %v797 = vld [vmem:[%s794 + $0x10] sm:$0xff]
  %v798 = vld [vmem:[%s794 + $0x18] sm:$0xff]
  %v800 = vsel %vm431, %v795, 0
  %v803 = vsel %vm431, %v796, 0
  %v806 = vsel %vm431, %v797, 0
  %v809 = vsel %vm431, %v798, 0
  %811 = vmatprep.subr.mxu0 %v787
  %812 = vmatpush1.msra.mxu0 %v786
  %813 = vmatprep.subr.mxu0 %v789
  %814 = vmatpush1.msra.mxu0 %v788
  %815 = vmatprep.subr.mxu0 %v791
  %816 = vmatpush1.msra.mxu0 %v790
  %817 = vmatprep.subr.mxu0 %v793
  %818 = vmatpush1.msra.mxu0 %v792
  %819 = vmatprep.subr.mxu0 0.0
  %820 = vmatpush1.msra.mxu0 0.0
  %821 = vmatprep.subr.mxu0 0.0
  %822 = vmatpush1.msra.mxu0 0.0
  %823 = vmatprep.subr.mxu0 0.0
  %824 = vmatpush1.msra.mxu0 0.0
  %825 = vmatprep.subr.mxu0 0.0
  %826 = vmatpush1.msra.mxu0 0.0
  %827 = vmatprep.subr.mxu0 0.0
  %828 = vmatpush1.msra.mxu0 0.0
  %829 = vmatprep.subr.mxu0 0.0
  %830 = vmatpush1.msra.mxu0 0.0
  %831 = vmatprep.subr.mxu0 0.0
  %832 = vmatpush1.msra.mxu0 0.0
  %833 = vmatprep.subr.mxu0 0.0
  %834 = vmatpush1.msra.mxu0 0.0
  %835 = vmatprep.subr.mxu0 0.0
  %836 = vmatpush1.msra.mxu0 0.0
  %837 = vmatprep.subr.mxu0 0.0
  %838 = vmatpush1.msra.mxu0 0.0
  %839 = vmatprep.subr.mxu0 0.0
  %840 = vmatpush1.msra.mxu0 0.0
  %841 = vmatprep.subr.mxu0 0.0
  %842 = vmatpush1.msra.mxu0 0.0
  %843 = vmatprep.subr.mxu0 0.0
  %844 = vmatpush1.msra.mxu0 0.0
  %845 = vmatprep.subr.mxu0 0.0
  %846 = vmatpush1.msra.mxu0 0.0
  %847 = vmatprep.subr.mxu0 0.0
  %848 = vmatpush1.msra.mxu0 0.0
  %849 = vmatprep.subr.mxu0 0.0
  %850 = vmatpush1.msra.mxu0 0.0
  %851 = vmatprep.subr.mxu0 0.0
  %852 = vmatpush1.msra.mxu0 0.0
  %853 = vmatprep.subr.mxu0 0.0
  %854 = vmatpush1.msra.mxu0 0.0
  %855 = vmatprep.subr.mxu0 0.0
  %856 = vmatpush1.msra.mxu0 0.0
  %857 = vmatprep.subr.mxu0 0.0
  %858 = vmatpush1.msra.mxu0 0.0
  %859 = vmatprep.subr.mxu0 0.0
  %860 = vmatpush1.msra.mxu0 0.0
  %861 = vmatprep.subr.mxu0 0.0
  %862 = vmatpush1.msra.mxu0 0.0
  %863 = vmatprep.subr.mxu0 0.0
  %864 = vmatpush1.msra.mxu0 0.0
  %865 = vmatprep.subr.mxu0 0.0
  %866 = vmatpush1.msra.mxu0 0.0
  %867 = vmatprep.subr.mxu0 0.0
  %868 = vmatpush1.msra.mxu0 0.0
  %869 = vmatprep.subr.mxu0 0.0
  %870 = vmatpush1.msra.mxu0 0.0
  %871 = vmatprep.subr.mxu0 0.0
  %872 = vmatpush1.msra.mxu0 0.0
  %873 = vmatprep.subr.mxu0 0.0
  %874 = vmatpush1.msra.mxu0 0.0
  %875 = vmatprep.mubr.f32.mxu0 0.0
  %876 = vmatmul.mubr.f32.gmra.mrb[0].mxu0 %v800
  %v877 = vpop.f32.mrb[0].mxu0
  %v878 = vadd.f32 0.0, %v877
  %v879 = vpop.f32.mrb[0].mxu0
  %v880 = vadd.f32 0.0, %v879
  %881 = vmatprep.mubr.f32.mxu0 0.0
  %882 = vmatmul.mubr.f32.gmra.mrb[0].mxu0 %v803
  %v883 = vpop.f32.mrb[0].mxu0
  %v884 = vadd.f32 0.0, %v883
  %v885 = vpop.f32.mrb[0].mxu0
  %v886 = vadd.f32 0.0, %v885
  %887 = vmatprep.mubr.f32.mxu0 0.0
  %888 = vmatmul.mubr.f32.gmra.mrb[0].mxu0 %v806
  %v889 = vpop.f32.mrb[0].mxu0
  %v890 = vadd.f32 0.0, %v889
  %v891 = vpop.f32.mrb[0].mxu0
  %v892 = vadd.f32 0.0, %v891
  %893 = vmatprep.mubr.f32.mxu0 0.0
  %894 = vmatmul.mubr.f32.gmra.mrb[0].mxu0 %v809
  %v895 = vpop.f32.mrb[0].mxu0
  %v896 = vadd.f32 0.0, %v895
  %v897 = vpop.f32.mrb[0].mxu0
  %v898 = vadd.f32 0.0, %v897
  %899 = vdwg.mxu0
  %v900 = vrot.slane %v878, 7
  %v901 = vrot.slane %v880, 7
  %v902 = vrot.slane %v884, 7
  %v903 = vrot.slane %v886, 7
  %v904 = vrot.slane %v890, 7
  %v905 = vrot.slane %v892, 7
  %v906 = vrot.slane %v896, 7
  %v907 = vrot.slane %v898, 7
  %vm908 = vcmp.lt.s32.totalorder %v13, 1
  %v909 = vsel %vm908, %v904, %v906
  %v910 = vsel %vm908, %v905, %v907
  %v911 = vsel %vm908, %v902, %v904
  %v912 = vsel %vm908, %v903, %v905
  %v913 = vsel %vm908, %v900, %v902
  %v914 = vsel %vm908, %v901, %v903
  %v915 = vsel %vm908, %v906, %v900
  %v916 = vsel %vm908, %v907, %v901
  %v917 = vrot.slane %v878, 1
  %v918 = vrot.slane %v880, 1
  %v919 = vrot.slane %v884, 1
  %v920 = vrot.slane %v886, 1
  %v921 = vrot.slane %v890, 1
  %v922 = vrot.slane %v892, 1
  %v923 = vrot.slane %v896, 1
  %v924 = vrot.slane %v898, 1
  %vm925 = vcmp.lt.s32.totalorder %v13, 7
  %v926 = vsel %vm925, %v921, %v923
  %v927 = vsel %vm925, %v922, %v924
  %v928 = vsel %vm925, %v919, %v921
  %v929 = vsel %vm925, %v920, %v922
  %v930 = vsel %vm925, %v917, %v919
  %v931 = vsel %vm925, %v918, %v920
  %v932 = vsel %vm925, %v923, %v917
  %v933 = vsel %vm925, %v924, %v918
  %v934 = vand.u32 %v13, 1
  %v935 = vand.u32 %v14, 1
  %v936 = vand.u32 %v15, 1
  %v937 = vand.u32 %v16, 1
  %vm938 = vcmp.ne.s32.totalorder %v934, 0
  %vm939 = vcmp.ne.s32.totalorder %v935, 0
  %vm940 = vcmp.ne.s32.totalorder %v936, 0
  %vm941 = vcmp.ne.s32.totalorder %v937, 0
  %v942 = vmul.f32 %v348, %v878
  %v943 = vmul.f32 %v352, %v880
  %v944 = vmul.f32 %v348, %v884
  %v945 = vmul.f32 %v352, %v886
  %v946 = vmul.f32 %v348, %v890
  %v947 = vmul.f32 %v352, %v892
  %v948 = vmul.f32 %v348, %v896
  %v949 = vmul.f32 %v352, %v898
  %v950 = vmul.f32 %v366, %v915
  %v951 = vmul.f32 %v370, %v916
  %v952 = vmul.f32 %v366, %v913
  %v953 = vmul.f32 %v370, %v914
  %v954 = vmul.f32 %v366, %v911
  %v955 = vmul.f32 %v370, %v912
  %v956 = vmul.f32 %v366, %v909
  %v957 = vmul.f32 %v370, %v910
  %v958 = vadd.f32 %v942, %v950
  %v959 = vadd.f32 %v943, %v951
  %v960 = vadd.f32 %v944, %v952
  %v961 = vadd.f32 %v945, %v953
  %v962 = vadd.f32 %v946, %v954
  %v963 = vadd.f32 %v947, %v955
  %v964 = vadd.f32 %v948, %v956
  %v965 = vadd.f32 %v949, %v957
  %v966 = vmul.f32 %v366, %v930
  %v967 = vmul.f32 %v370, %v931
  %v968 = vmul.f32 %v366, %v928
  %v969 = vmul.f32 %v370, %v929
  %v970 = vmul.f32 %v366, %v926
  %v971 = vmul.f32 %v370, %v927
  %v972 = vmul.f32 %v366, %v932
  %v973 = vmul.f32 %v370, %v933
  %v974 = vsub.f32 %v942, %v966
  %v975 = vsub.f32 %v943, %v967
  %v976 = vsub.f32 %v944, %v968
  %v977 = vsub.f32 %v945, %v969
  %v978 = vsub.f32 %v946, %v970
  %v979 = vsub.f32 %v947, %v971
  %v980 = vsub.f32 %v948, %v972
  %v981 = vsub.f32 %v949, %v973
  %v982 = vsel %vm938, %v958, %v974
  %v983 = vsel %vm938, %v959, %v975
  %v984 = vsel %vm939, %v960, %v976
  %v985 = vsel %vm939, %v961, %v977
  %v986 = vsel %vm940, %v962, %v978
  %v987 = vsel %vm940, %v963, %v979
  %v988 = vsel %vm941, %v964, %v980
  %v989 = vsel %vm941, %v965, %v981
  %s990 = scalar_lea.vmem %s1, 96
  %v991 = vld [vmem:[%s990] sm:$0xff]
  %v992 = vld [vmem:[%s990 + $0x8] sm:$0xff]
  %v993 = vld [vmem:[%s990 + $0x10] sm:$0xff]
  %v994 = vld [vmem:[%s990 + $0x18] sm:$0xff]
  %v996 = vsel %vm431, %v991, 0
  %v999 = vsel %vm431, %v992, 0
  %v1002 = vsel %vm431, %v993, 0
  %v1005 = vsel %vm431, %v994, 0
  %1007 = vmatprep.subr.mxu0 %v983
  %1008 = vmatpush1.msra.mxu0 %v982
  %1009 = vmatprep.subr.mxu0 %v985
  %1010 = vmatpush1.msra.mxu0 %v984
  %1011 = vmatprep.subr.mxu0 %v987
  %1012 = vmatpush1.msra.mxu0 %v986
  %1013 = vmatprep.subr.mxu0 %v989
  %1014 = vmatpush1.msra.mxu0 %v988
  %1015 = vmatprep.subr.mxu0 0.0
  %1016 = vmatpush1.msra.mxu0 0.0
  %1017 = vmatprep.subr.mxu0 0.0
  %1018 = vmatpush1.msra.mxu0 0.0
  %1019 = vmatprep.subr.mxu0 0.0
  %1020 = vmatpush1.msra.mxu0 0.0
  %1021 = vmatprep.subr.mxu0 0.0
  %1022 = vmatpush1.msra.mxu0 0.0
  %1023 = vmatprep.subr.mxu0 0.0
  %1024 = vmatpush1.msra.mxu0 0.0
  %1025 = vmatprep.subr.mxu0 0.0
  %1026 = vmatpush1.msra.mxu0 0.0
  %1027 = vmatprep.subr.mxu0 0.0
  %1028 = vmatpush1.msra.mxu0 0.0
  %1029 = vmatprep.subr.mxu0 0.0
  %1030 = vmatpush1.msra.mxu0 0.0
  %1031 = vmatprep.subr.mxu0 0.0
  %1032 = vmatpush1.msra.mxu0 0.0
  %1033 = vmatprep.subr.mxu0 0.0
  %1034 = vmatpush1.msra.mxu0 0.0
  %1035 = vmatprep.subr.mxu0 0.0
  %1036 = vmatpush1.msra.mxu0 0.0
  %1037 = vmatprep.subr.mxu0 0.0
  %1038 = vmatpush1.msra.mxu0 0.0
  %1039 = vmatprep.subr.mxu0 0.0
  %1040 = vmatpush1.msra.mxu0 0.0
  %1041 = vmatprep.subr.mxu0 0.0
  %1042 = vmatpush1.msra.mxu0 0.0
  %1043 = vmatprep.subr.mxu0 0.0
  %1044 = vmatpush1.msra.mxu0 0.0
  %1045 = vmatprep.subr.mxu0 0.0
  %1046 = vmatpush1.msra.mxu0 0.0
  %1047 = vmatprep.subr.mxu0 0.0
  %1048 = vmatpush1.msra.mxu0 0.0
  %1049 = vmatprep.subr.mxu0 0.0
  %1050 = vmatpush1.msra.mxu0 0.0
  %1051 = vmatprep.subr.mxu0 0.0
  %1052 = vmatpush1.msra.mxu0 0.0
  %1053 = vmatprep.subr.mxu0 0.0
  %1054 = vmatpush1.msra.mxu0 0.0
  %1055 = vmatprep.subr.mxu0 0.0
  %1056 = vmatpush1.msra.mxu0 0.0
  %1057 = vmatprep.subr.mxu0 0.0
  %1058 = vmatpush1.msra.mxu0 0.0
  %1059 = vmatprep.subr.mxu0 0.0
  %1060 = vmatpush1.msra.mxu0 0.0
  %1061 = vmatprep.subr.mxu0 0.0
  %1062 = vmatpush1.msra.mxu0 0.0
  %1063 = vmatprep.subr.mxu0 0.0
  %1064 = vmatpush1.msra.mxu0 0.0
  %1065 = vmatprep.subr.mxu0 0.0
  %1066 = vmatpush1.msra.mxu0 0.0
  %1067 = vmatprep.subr.mxu0 0.0
  %1068 = vmatpush1.msra.mxu0 0.0
  %1069 = vmatprep.subr.mxu0 0.0
  %1070 = vmatpush1.msra.mxu0 0.0
  %1071 = vmatprep.mubr.f32.mxu0 0.0
  %1072 = vmatmul.mubr.f32.gmra.mrb[0].mxu0 %v996
  %v1073 = vpop.f32.mrb[0].mxu0
  %v1074 = vadd.f32 0.0, %v1073
  %v1075 = vpop.f32.mrb[0].mxu0
  %v1076 = vadd.f32 0.0, %v1075
  %1077 = vmatprep.mubr.f32.mxu0 0.0
  %1078 = vmatmul.mubr.f32.gmra.mrb[0].mxu0 %v999
  %v1079 = vpop.f32.mrb[0].mxu0
  %v1080 = vadd.f32 0.0, %v1079
  %v1081 = vpop.f32.mrb[0].mxu0
  %v1082 = vadd.f32 0.0, %v1081
  %1083 = vmatprep.mubr.f32.mxu0 0.0
  %1084 = vmatmul.mubr.f32.gmra.mrb[0].mxu0 %v1002
  %v1085 = vpop.f32.mrb[0].mxu0
  %v1086 = vadd.f32 0.0, %v1085
  %v1087 = vpop.f32.mrb[0].mxu0
  %v1088 = vadd.f32 0.0, %v1087
  %1089 = vmatprep.mubr.f32.mxu0 0.0
  %1090 = vmatmul.mubr.f32.gmra.mrb[0].mxu0 %v1005
  %v1091 = vpop.f32.mrb[0].mxu0
  %v1092 = vadd.f32 0.0, %v1091
  %v1093 = vpop.f32.mrb[0].mxu0
  %v1094 = vadd.f32 0.0, %v1093
  %1095 = vdwg.mxu0
  %v1096 = vmul.f32 %v135, %v1074
  %v1097 = vmul.f32 %v139, %v1076
  %v1098 = vmul.f32 %v135, %v1080
  %v1099 = vmul.f32 %v139, %v1082
  %v1100 = vmul.f32 %v135, %v1086
  %v1101 = vmul.f32 %v139, %v1088
  %v1102 = vmul.f32 %v135, %v1092
  %v1103 = vmul.f32 %v139, %v1094
  %v1104 = vmul.f32 %v258, %v1092
  %v1105 = vmul.f32 %v262, %v1094
  %v1106 = vmul.f32 %v258, %v1074
  %v1107 = vmul.f32 %v262, %v1076
  %v1108 = vmul.f32 %v258, %v1080
  %v1109 = vmul.f32 %v262, %v1082
  %v1110 = vmul.f32 %v258, %v1086
  %v1111 = vmul.f32 %v262, %v1088
  %v1112 = vadd.f32 %v1096, %v1104
  %v1113 = vadd.f32 %v1097, %v1105
  %v1114 = vadd.f32 %v1098, %v1106
  %v1115 = vadd.f32 %v1099, %v1107
  %v1116 = vadd.f32 %v1100, %v1108
  %v1117 = vadd.f32 %v1101, %v1109
  %v1118 = vadd.f32 %v1102, %v1110
  %v1119 = vadd.f32 %v1103, %v1111
  %v1120 = vsub.f32 %v1096, %v1108
  %v1121 = vsub.f32 %v1097, %v1109
  %v1122 = vsub.f32 %v1098, %v1110
  %v1123 = vsub.f32 %v1099, %v1111
  %v1124 = vsub.f32 %v1100, %v1104
  %v1125 = vsub.f32 %v1101, %v1105
  %v1126 = vsub.f32 %v1102, %v1106
  %v1127 = vsub.f32 %v1103, %v1107
  %v1128 = vsel %vm383, %v1112, %v1120
  %v1129 = vsel %vm383, %v1113, %v1121
  %v1130 = vsel %vm384, %v1114, %v1122
  %v1131 = vsel %vm384, %v1115, %v1123
  %v1132 = vsel %vm385, %v1116, %v1124
  %v1133 = vsel %vm385, %v1117, %v1125
  %v1134 = vsel %vm386, %v1118, %v1126
  %v1135 = vsel %vm386, %v1119, %v1127
  %s1136 = scalar_lea.vmem %s1, 128
  %v1137 = vld [vmem:[%s1136] sm:$0xff]
  %v1138 = vld [vmem:[%s1136 + $0x8] sm:$0xff]
  %v1139 = vld [vmem:[%s1136 + $0x10] sm:$0xff]
  %v1140 = vld [vmem:[%s1136 + $0x18] sm:$0xff]
  %v1142 = vsel %vm431, %v1137, 0
  %v1145 = vsel %vm431, %v1138, 0
  %v1148 = vsel %vm431, %v1139, 0
  %v1151 = vsel %vm431, %v1140, 0
  %1153 = vmatprep.subr.mxu0 %v1129
  %1154 = vmatpush1.msra.mxu0 %v1128
  %1155 = vmatprep.subr.mxu0 %v1131
  %1156 = vmatpush1.msra.mxu0 %v1130
  %1157 = vmatprep.subr.mxu0 %v1133
  %1158 = vmatpush1.msra.mxu0 %v1132
  %1159 = vmatprep.subr.mxu0 %v1135
  %1160 = vmatpush1.msra.mxu0 %v1134
  %1161 = vmatprep.subr.mxu0 0.0
  %1162 = vmatpush1.msra.mxu0 0.0
  %1163 = vmatprep.subr.mxu0 0.0
  %1164 = vmatpush1.msra.mxu0 0.0
  %1165 = vmatprep.subr.mxu0 0.0
  %1166 = vmatpush1.msra.mxu0 0.0
  %1167 = vmatprep.subr.mxu0 0.0
  %1168 = vmatpush1.msra.mxu0 0.0
  %1169 = vmatprep.subr.mxu0 0.0
  %1170 = vmatpush1.msra.mxu0 0.0
  %1171 = vmatprep.subr.mxu0 0.0
  %1172 = vmatpush1.msra.mxu0 0.0
  %1173 = vmatprep.subr.mxu0 0.0
  %1174 = vmatpush1.msra.mxu0 0.0
  %1175 = vmatprep.subr.mxu0 0.0
  %1176 = vmatpush1.msra.mxu0 0.0
  %1177 = vmatprep.subr.mxu0 0.0
  %1178 = vmatpush1.msra.mxu0 0.0
  %1179 = vmatprep.subr.mxu0 0.0
  %1180 = vmatpush1.msra.mxu0 0.0
  %1181 = vmatprep.subr.mxu0 0.0
  %1182 = vmatpush1.msra.mxu0 0.0
  %1183 = vmatprep.subr.mxu0 0.0
  %1184 = vmatpush1.msra.mxu0 0.0
  %1185 = vmatprep.subr.mxu0 0.0
  %1186 = vmatpush1.msra.mxu0 0.0
  %1187 = vmatprep.subr.mxu0 0.0
  %1188 = vmatpush1.msra.mxu0 0.0
  %1189 = vmatprep.subr.mxu0 0.0
  %1190 = vmatpush1.msra.mxu0 0.0
  %1191 = vmatprep.subr.mxu0 0.0
  %1192 = vmatpush1.msra.mxu0 0.0
  %1193 = vmatprep.subr.mxu0 0.0
  %1194 = vmatpush1.msra.mxu0 0.0
  %1195 = vmatprep.subr.mxu0 0.0
  %1196 = vmatpush1.msra.mxu0 0.0
  %1197 = vmatprep.subr.mxu0 0.0
  %1198 = vmatpush1.msra.mxu0 0.0
  %1199 = vmatprep.subr.mxu0 0.0
  %1200 = vmatpush1.msra.mxu0 0.0
  %1201 = vmatprep.subr.mxu0 0.0
  %1202 = vmatpush1.msra.mxu0 0.0
  %1203 = vmatprep.subr.mxu0 0.0
  %1204 = vmatpush1.msra.mxu0 0.0
  %1205 = vmatprep.subr.mxu0 0.0
  %1206 = vmatpush1.msra.mxu0 0.0
  %1207 = vmatprep.subr.mxu0 0.0
  %1208 = vmatpush1.msra.mxu0 0.0
  %1209 = vmatprep.subr.mxu0 0.0
  %1210 = vmatpush1.msra.mxu0 0.0
  %1211 = vmatprep.subr.mxu0 0.0
  %1212 = vmatpush1.msra.mxu0 0.0
  %1213 = vmatprep.subr.mxu0 0.0
  %1214 = vmatpush1.msra.mxu0 0.0
  %1215 = vmatprep.subr.mxu0 0.0
  %1216 = vmatpush1.msra.mxu0 0.0
  %1217 = vmatprep.mubr.f32.mxu0 0.0
  %1218 = vmatmul.mubr.f32.gmra.mrb[0].mxu0 %v1142
  %v1219 = vpop.f32.mrb[0].mxu0
  %v1220 = vadd.f32 0.0, %v1219
  %v1221 = vpop.f32.mrb[0].mxu0
  %v1222 = vadd.f32 0.0, %v1221
  %1223 = vmatprep.mubr.f32.mxu0 0.0
  %1224 = vmatmul.mubr.f32.gmra.mrb[0].mxu0 %v1145
  %v1225 = vpop.f32.mrb[0].mxu0
  %v1226 = vadd.f32 0.0, %v1225
  %v1227 = vpop.f32.mrb[0].mxu0
  %v1228 = vadd.f32 0.0, %v1227
  %1229 = vmatprep.mubr.f32.mxu0 0.0
  %1230 = vmatmul.mubr.f32.gmra.mrb[0].mxu0 %v1148
  %v1231 = vpop.f32.mrb[0].mxu0
  %v1232 = vadd.f32 0.0, %v1231
  %v1233 = vpop.f32.mrb[0].mxu0
  %v1234 = vadd.f32 0.0, %v1233
  %1235 = vmatprep.mubr.f32.mxu0 0.0
  %1236 = vmatmul.mubr.f32.gmra.mrb[0].mxu0 %v1151
  %v1237 = vpop.f32.mrb[0].mxu0
  %v1238 = vadd.f32 0.0, %v1237
  %v1239 = vpop.f32.mrb[0].mxu0
  %v1240 = vadd.f32 0.0, %v1239
  %1241 = vdwg.mxu0
  %v1242 = vrot.slane %v1220, 6
  %v1243 = vrot.slane %v1222, 6
  %v1244 = vrot.slane %v1226, 6
  %v1245 = vrot.slane %v1228, 6
  %v1246 = vrot.slane %v1232, 6
  %v1247 = vrot.slane %v1234, 6
  %v1248 = vrot.slane %v1238, 6
  %v1249 = vrot.slane %v1240, 6
  %v1250 = vsel %vm541, %v1246, %v1248
  %v1251 = vsel %vm541, %v1247, %v1249
  %v1252 = vsel %vm541, %v1244, %v1246
  %v1253 = vsel %vm541, %v1245, %v1247
  %v1254 = vsel %vm541, %v1242, %v1244
  %v1255 = vsel %vm541, %v1243, %v1245
  %v1256 = vsel %vm541, %v1248, %v1242
  %v1257 = vsel %vm541, %v1249, %v1243
  %v1258 = vrot.slane %v1220, 2
  %v1259 = vrot.slane %v1222, 2
  %v1260 = vrot.slane %v1226, 2
  %v1261 = vrot.slane %v1228, 2
  %v1262 = vrot.slane %v1232, 2
  %v1263 = vrot.slane %v1234, 2
  %v1264 = vrot.slane %v1238, 2
  %v1265 = vrot.slane %v1240, 2
  %v1266 = vsel %vm558, %v1262, %v1264
  %v1267 = vsel %vm558, %v1263, %v1265
  %v1268 = vsel %vm558, %v1260, %v1262
  %v1269 = vsel %vm558, %v1261, %v1263
  %v1270 = vsel %vm558, %v1258, %v1260
  %v1271 = vsel %vm558, %v1259, %v1261
  %v1272 = vsel %vm558, %v1264, %v1258
  %v1273 = vsel %vm558, %v1265, %v1259
  %v1274 = vmul.f32 %v312, %v1220
  %v1275 = vmul.f32 %v316, %v1222
  %v1276 = vmul.f32 %v312, %v1226
  %v1277 = vmul.f32 %v316, %v1228
  %v1278 = vmul.f32 %v312, %v1232
  %v1279 = vmul.f32 %v316, %v1234
  %v1280 = vmul.f32 %v312, %v1238
  %v1281 = vmul.f32 %v316, %v1240
  %v1282 = vmul.f32 %v330, %v1256
  %v1283 = vmul.f32 %v334, %v1257
  %v1284 = vmul.f32 %v330, %v1254
  %v1285 = vmul.f32 %v334, %v1255
  %v1286 = vmul.f32 %v330, %v1252
  %v1287 = vmul.f32 %v334, %v1253
  %v1288 = vmul.f32 %v330, %v1250
  %v1289 = vmul.f32 %v334, %v1251
  %v1290 = vadd.f32 %v1274, %v1282
  %v1291 = vadd.f32 %v1275, %v1283
  %v1292 = vadd.f32 %v1276, %v1284
  %v1293 = vadd.f32 %v1277, %v1285
  %v1294 = vadd.f32 %v1278, %v1286
  %v1295 = vadd.f32 %v1279, %v1287
  %v1296 = vadd.f32 %v1280, %v1288
  %v1297 = vadd.f32 %v1281, %v1289
  %v1298 = vmul.f32 %v330, %v1270
  %v1299 = vmul.f32 %v334, %v1271
  %v1300 = vmul.f32 %v330, %v1268
  %v1301 = vmul.f32 %v334, %v1269
  %v1302 = vmul.f32 %v330, %v1266
  %v1303 = vmul.f32 %v334, %v1267
  %v1304 = vmul.f32 %v330, %v1272
  %v1305 = vmul.f32 %v334, %v1273
  %v1306 = vsub.f32 %v1274, %v1298
  %v1307 = vsub.f32 %v1275, %v1299
  %v1308 = vsub.f32 %v1276, %v1300
  %v1309 = vsub.f32 %v1277, %v1301
  %v1310 = vsub.f32 %v1278, %v1302
  %v1311 = vsub.f32 %v1279, %v1303
  %v1312 = vsub.f32 %v1280, %v1304
  %v1313 = vsub.f32 %v1281, %v1305
  %v1314 = vsel %vm571, %v1290, %v1306
  %v1315 = vsel %vm571, %v1291, %v1307
  %v1316 = vsel %vm572, %v1292, %v1308
  %v1317 = vsel %vm572, %v1293, %v1309
  %v1318 = vsel %vm573, %v1294, %v1310
  %v1319 = vsel %vm573, %v1295, %v1311
  %v1320 = vsel %vm574, %v1296, %v1312
  %v1321 = vsel %vm574, %v1297, %v1313
  %s1322 = scalar_lea.vmem %s1, 160
  %v1323 = vld [vmem:[%s1322] sm:$0xff]
  %v1324 = vld [vmem:[%s1322 + $0x8] sm:$0xff]
  %v1325 = vld [vmem:[%s1322 + $0x10] sm:$0xff]
  %v1326 = vld [vmem:[%s1322 + $0x18] sm:$0xff]
  %v1328 = vsel %vm431, %v1323, 0
  %v1331 = vsel %vm431, %v1324, 0
  %v1334 = vsel %vm431, %v1325, 0
  %v1337 = vsel %vm431, %v1326, 0
  %1339 = vmatprep.subr.mxu0 %v1315
  %1340 = vmatpush1.msra.mxu0 %v1314
  %1341 = vmatprep.subr.mxu0 %v1317
  %1342 = vmatpush1.msra.mxu0 %v1316
  %1343 = vmatprep.subr.mxu0 %v1319
  %1344 = vmatpush1.msra.mxu0 %v1318
  %1345 = vmatprep.subr.mxu0 %v1321
  %1346 = vmatpush1.msra.mxu0 %v1320
  %1347 = vmatprep.subr.mxu0 0.0
  %1348 = vmatpush1.msra.mxu0 0.0
  %1349 = vmatprep.subr.mxu0 0.0
  %1350 = vmatpush1.msra.mxu0 0.0
  %1351 = vmatprep.subr.mxu0 0.0
  %1352 = vmatpush1.msra.mxu0 0.0
  %1353 = vmatprep.subr.mxu0 0.0
  %1354 = vmatpush1.msra.mxu0 0.0
  %1355 = vmatprep.subr.mxu0 0.0
  %1356 = vmatpush1.msra.mxu0 0.0
  %1357 = vmatprep.subr.mxu0 0.0
  %1358 = vmatpush1.msra.mxu0 0.0
  %1359 = vmatprep.subr.mxu0 0.0
  %1360 = vmatpush1.msra.mxu0 0.0
  %1361 = vmatprep.subr.mxu0 0.0
  %1362 = vmatpush1.msra.mxu0 0.0
  %1363 = vmatprep.subr.mxu0 0.0
  %1364 = vmatpush1.msra.mxu0 0.0
  %1365 = vmatprep.subr.mxu0 0.0
  %1366 = vmatpush1.msra.mxu0 0.0
  %1367 = vmatprep.subr.mxu0 0.0
  %1368 = vmatpush1.msra.mxu0 0.0
  %1369 = vmatprep.subr.mxu0 0.0
  %1370 = vmatpush1.msra.mxu0 0.0
  %1371 = vmatprep.subr.mxu0 0.0
  %1372 = vmatpush1.msra.mxu0 0.0
  %1373 = vmatprep.subr.mxu0 0.0
  %1374 = vmatpush1.msra.mxu0 0.0
  %1375 = vmatprep.subr.mxu0 0.0
  %1376 = vmatpush1.msra.mxu0 0.0
  %1377 = vmatprep.subr.mxu0 0.0
  %1378 = vmatpush1.msra.mxu0 0.0
  %1379 = vmatprep.subr.mxu0 0.0
  %1380 = vmatpush1.msra.mxu0 0.0
  %1381 = vmatprep.subr.mxu0 0.0
  %1382 = vmatpush1.msra.mxu0 0.0
  %1383 = vmatprep.subr.mxu0 0.0
  %1384 = vmatpush1.msra.mxu0 0.0
  %1385 = vmatprep.subr.mxu0 0.0
  %1386 = vmatpush1.msra.mxu0 0.0
  %1387 = vmatprep.subr.mxu0 0.0
  %1388 = vmatpush1.msra.mxu0 0.0
  %1389 = vmatprep.subr.mxu0 0.0
  %1390 = vmatpush1.msra.mxu0 0.0
  %1391 = vmatprep.subr.mxu0 0.0
  %1392 = vmatpush1.msra.mxu0 0.0
  %1393 = vmatprep.subr.mxu0 0.0
  %1394 = vmatpush1.msra.mxu0 0.0
  %1395 = vmatprep.subr.mxu0 0.0
  %1396 = vmatpush1.msra.mxu0 0.0
  %1397 = vmatprep.subr.mxu0 0.0
  %1398 = vmatpush1.msra.mxu0 0.0
  %1399 = vmatprep.subr.mxu0 0.0
  %1400 = vmatpush1.msra.mxu0 0.0
  %1401 = vmatprep.subr.mxu0 0.0
  %1402 = vmatpush1.msra.mxu0 0.0
  %1403 = vmatprep.mubr.f32.mxu0 0.0
  %1404 = vmatmul.mubr.f32.gmra.mrb[0].mxu0 %v1328
  %v1405 = vpop.f32.mrb[0].mxu0
  %v1406 = vadd.f32 0.0, %v1405
  %v1407 = vpop.f32.mrb[0].mxu0
  %v1408 = vadd.f32 0.0, %v1407
  %1409 = vmatprep.mubr.f32.mxu0 0.0
  %1410 = vmatmul.mubr.f32.gmra.mrb[0].mxu0 %v1331
  %v1411 = vpop.f32.mrb[0].mxu0
  %v1412 = vadd.f32 0.0, %v1411
  %v1413 = vpop.f32.mrb[0].mxu0
  %v1414 = vadd.f32 0.0, %v1413
  %1415 = vmatprep.mubr.f32.mxu0 0.0
  %1416 = vmatmul.mubr.f32.gmra.mrb[0].mxu0 %v1334
  %v1417 = vpop.f32.mrb[0].mxu0
  %v1418 = vadd.f32 0.0, %v1417
  %v1419 = vpop.f32.mrb[0].mxu0
  %v1420 = vadd.f32 0.0, %v1419
  %1421 = vmatprep.mubr.f32.mxu0 0.0
  %1422 = vmatmul.mubr.f32.gmra.mrb[0].mxu0 %v1337
  %v1423 = vpop.f32.mrb[0].mxu0
  %v1424 = vadd.f32 0.0, %v1423
  %v1425 = vpop.f32.mrb[0].mxu0
  %v1426 = vadd.f32 0.0, %v1425
  %1427 = vdwg.mxu0
  %v1428 = vrot.slane %v1406, 4
  %v1429 = vrot.slane %v1408, 4
  %v1430 = vrot.slane %v1412, 4
  %v1431 = vrot.slane %v1414, 4
  %v1432 = vrot.slane %v1418, 4
  %v1433 = vrot.slane %v1420, 4
  %v1434 = vrot.slane %v1424, 4
  %v1435 = vrot.slane %v1426, 4
  %v1436 = vsel %vm737, %v1432, %v1434
  %v1437 = vsel %vm737, %v1433, %v1435
  %v1438 = vsel %vm737, %v1430, %v1432
  %v1439 = vsel %vm737, %v1431, %v1433
  %v1440 = vsel %vm737, %v1428, %v1430
  %v1441 = vsel %vm737, %v1429, %v1431
  %v1442 = vsel %vm737, %v1434, %v1428
  %v1443 = vsel %vm737, %v1435, %v1429
  %v1444 = vmul.f32 %v276, %v1406
  %v1445 = vmul.f32 %v280, %v1408
  %v1446 = vmul.f32 %v276, %v1412
  %v1447 = vmul.f32 %v280, %v1414
  %v1448 = vmul.f32 %v276, %v1418
  %v1449 = vmul.f32 %v280, %v1420
  %v1450 = vmul.f32 %v276, %v1424
  %v1451 = vmul.f32 %v280, %v1426
  %v1452 = vmul.f32 %v294, %v1442
  %v1453 = vmul.f32 %v298, %v1443
  %v1454 = vmul.f32 %v294, %v1440
  %v1455 = vmul.f32 %v298, %v1441
  %v1456 = vmul.f32 %v294, %v1438
  %v1457 = vmul.f32 %v298, %v1439
  %v1458 = vmul.f32 %v294, %v1436
  %v1459 = vmul.f32 %v298, %v1437
  %v1460 = vadd.f32 %v1444, %v1452
  %v1461 = vadd.f32 %v1445, %v1453
  %v1462 = vadd.f32 %v1446, %v1454
  %v1463 = vadd.f32 %v1447, %v1455
  %v1464 = vadd.f32 %v1448, %v1456
  %v1465 = vadd.f32 %v1449, %v1457
  %v1466 = vadd.f32 %v1450, %v1458
  %v1467 = vadd.f32 %v1451, %v1459
  %v1468 = vsub.f32 %v1444, %v1454
  %v1469 = vsub.f32 %v1445, %v1455
  %v1470 = vsub.f32 %v1446, %v1456
  %v1471 = vsub.f32 %v1447, %v1457
  %v1472 = vsub.f32 %v1448, %v1458
  %v1473 = vsub.f32 %v1449, %v1459
  %v1474 = vsub.f32 %v1450, %v1452
  %v1475 = vsub.f32 %v1451, %v1453
  %v1476 = vsel %vm750, %v1460, %v1468
  %v1477 = vsel %vm750, %v1461, %v1469
  %v1478 = vsel %vm751, %v1462, %v1470
  %v1479 = vsel %vm751, %v1463, %v1471
  %v1480 = vsel %vm752, %v1464, %v1472
  %v1481 = vsel %vm752, %v1465, %v1473
  %v1482 = vsel %vm753, %v1466, %v1474
  %v1483 = vsel %vm753, %v1467, %v1475
  %s1484 = scalar_lea.vmem %s1, 192
  %v1485 = vld [vmem:[%s1484] sm:$0xff]
  %v1486 = vld [vmem:[%s1484 + $0x8] sm:$0xff]
  %v1487 = vld [vmem:[%s1484 + $0x10] sm:$0xff]
  %v1488 = vld [vmem:[%s1484 + $0x18] sm:$0xff]
  %v1490 = vsel %vm431, %v1485, 0
  %v1493 = vsel %vm431, %v1486, 0
  %v1496 = vsel %vm431, %v1487, 0
  %v1499 = vsel %vm431, %v1488, 0
  %1501 = vmatprep.subr.mxu0 %v1477
  %1502 = vmatpush1.msra.mxu0 %v1476
  %1503 = vmatprep.subr.mxu0 %v1479
  %1504 = vmatpush1.msra.mxu0 %v1478
  %1505 = vmatprep.subr.mxu0 %v1481
  %1506 = vmatpush1.msra.mxu0 %v1480
  %1507 = vmatprep.subr.mxu0 %v1483
  %1508 = vmatpush1.msra.mxu0 %v1482
  %1509 = vmatprep.subr.mxu0 0.0
  %1510 = vmatpush1.msra.mxu0 0.0
  %1511 = vmatprep.subr.mxu0 0.0
  %1512 = vmatpush1.msra.mxu0 0.0
  %1513 = vmatprep.subr.mxu0 0.0
  %1514 = vmatpush1.msra.mxu0 0.0
  %1515 = vmatprep.subr.mxu0 0.0
  %1516 = vmatpush1.msra.mxu0 0.0
  %1517 = vmatprep.subr.mxu0 0.0
  %1518 = vmatpush1.msra.mxu0 0.0
  %1519 = vmatprep.subr.mxu0 0.0
  %1520 = vmatpush1.msra.mxu0 0.0
  %1521 = vmatprep.subr.mxu0 0.0
  %1522 = vmatpush1.msra.mxu0 0.0
  %1523 = vmatprep.subr.mxu0 0.0
  %1524 = vmatpush1.msra.mxu0 0.0
  %1525 = vmatprep.subr.mxu0 0.0
  %1526 = vmatpush1.msra.mxu0 0.0
  %1527 = vmatprep.subr.mxu0 0.0
  %1528 = vmatpush1.msra.mxu0 0.0
  %1529 = vmatprep.subr.mxu0 0.0
  %1530 = vmatpush1.msra.mxu0 0.0
  %1531 = vmatprep.subr.mxu0 0.0
  %1532 = vmatpush1.msra.mxu0 0.0
  %1533 = vmatprep.subr.mxu0 0.0
  %1534 = vmatpush1.msra.mxu0 0.0
  %1535 = vmatprep.subr.mxu0 0.0
  %1536 = vmatpush1.msra.mxu0 0.0
  %1537 = vmatprep.subr.mxu0 0.0
  %1538 = vmatpush1.msra.mxu0 0.0
  %1539 = vmatprep.subr.mxu0 0.0
  %1540 = vmatpush1.msra.mxu0 0.0
  %1541 = vmatprep.subr.mxu0 0.0
  %1542 = vmatpush1.msra.mxu0 0.0
  %1543 = vmatprep.subr.mxu0 0.0
  %1544 = vmatpush1.msra.mxu0 0.0
  %1545 = vmatprep.subr.mxu0 0.0
  %1546 = vmatpush1.msra.mxu0 0.0
  %1547 = vmatprep.subr.mxu0 0.0
  %1548 = vmatpush1.msra.mxu0 0.0
  %1549 = vmatprep.subr.mxu0 0.0
  %1550 = vmatpush1.msra.mxu0 0.0
  %1551 = vmatprep.subr.mxu0 0.0
  %1552 = vmatpush1.msra.mxu0 0.0
  %1553 = vmatprep.subr.mxu0 0.0
  %1554 = vmatpush1.msra.mxu0 0.0
  %1555 = vmatprep.subr.mxu0 0.0
  %1556 = vmatpush1.msra.mxu0 0.0
  %1557 = vmatprep.subr.mxu0 0.0
  %1558 = vmatpush1.msra.mxu0 0.0
  %1559 = vmatprep.subr.mxu0 0.0
  %1560 = vmatpush1.msra.mxu0 0.0
  %1561 = vmatprep.subr.mxu0 0.0
  %1562 = vmatpush1.msra.mxu0 0.0
  %1563 = vmatprep.subr.mxu0 0.0
  %1564 = vmatpush1.msra.mxu0 0.0
  %1565 = vmatprep.mubr.f32.mxu0 0.0
  %1566 = vmatmul.mubr.f32.gmra.mrb[0].mxu0 %v1490
  %v1567 = vpop.f32.mrb[0].mxu0
  %v1568 = vadd.f32 0.0, %v1567
  %v1569 = vpop.f32.mrb[0].mxu0
  %v1570 = vadd.f32 0.0, %v1569
  %1571 = vmatprep.mubr.f32.mxu0 0.0
  %1572 = vmatmul.mubr.f32.gmra.mrb[0].mxu0 %v1493
  %v1573 = vpop.f32.mrb[0].mxu0
  %v1574 = vadd.f32 0.0, %v1573
  %v1575 = vpop.f32.mrb[0].mxu0
  %v1576 = vadd.f32 0.0, %v1575
  %1577 = vmatprep.mubr.f32.mxu0 0.0
  %1578 = vmatmul.mubr.f32.gmra.mrb[0].mxu0 %v1496
  %v1579 = vpop.f32.mrb[0].mxu0
  %v1580 = vadd.f32 0.0, %v1579
  %v1581 = vpop.f32.mrb[0].mxu0
  %v1582 = vadd.f32 0.0, %v1581
  %1583 = vmatprep.mubr.f32.mxu0 0.0
  %1584 = vmatmul.mubr.f32.gmra.mrb[0].mxu0 %v1499
  %v1585 = vpop.f32.mrb[0].mxu0
  %v1586 = vadd.f32 0.0, %v1585
  %v1587 = vpop.f32.mrb[0].mxu0
  %v1588 = vadd.f32 0.0, %v1587
  %1589 = vdwg.mxu0
  %v1590 = vrot.slane %v1568, 7
  %v1591 = vrot.slane %v1570, 7
  %v1592 = vrot.slane %v1574, 7
  %v1593 = vrot.slane %v1576, 7
  %v1594 = vrot.slane %v1580, 7
  %v1595 = vrot.slane %v1582, 7
  %v1596 = vrot.slane %v1586, 7
  %v1597 = vrot.slane %v1588, 7
  %v1598 = vsel %vm908, %v1594, %v1596
  %v1599 = vsel %vm908, %v1595, %v1597
  %v1600 = vsel %vm908, %v1592, %v1594
  %v1601 = vsel %vm908, %v1593, %v1595
  %v1602 = vsel %vm908, %v1590, %v1592
  %v1603 = vsel %vm908, %v1591, %v1593
  %v1604 = vsel %vm908, %v1596, %v1590
  %v1605 = vsel %vm908, %v1597, %v1591
  %v1606 = vrot.slane %v1568, 1
  %v1607 = vrot.slane %v1570, 1
  %v1608 = vrot.slane %v1574, 1
  %v1609 = vrot.slane %v1576, 1
  %v1610 = vrot.slane %v1580, 1
  %v1611 = vrot.slane %v1582, 1
  %v1612 = vrot.slane %v1586, 1
  %v1613 = vrot.slane %v1588, 1
  %v1614 = vsel %vm925, %v1610, %v1612
  %v1615 = vsel %vm925, %v1611, %v1613
  %v1616 = vsel %vm925, %v1608, %v1610
  %v1617 = vsel %vm925, %v1609, %v1611
  %v1618 = vsel %vm925, %v1606, %v1608
  %v1619 = vsel %vm925, %v1607, %v1609
  %v1620 = vsel %vm925, %v1612, %v1606
  %v1621 = vsel %vm925, %v1613, %v1607
  %v1622 = vmul.f32 %v348, %v1568
  %v1623 = vmul.f32 %v352, %v1570
  %v1624 = vmul.f32 %v348, %v1574
  %v1625 = vmul.f32 %v352, %v1576
  %v1626 = vmul.f32 %v348, %v1580
  %v1627 = vmul.f32 %v352, %v1582
  %v1628 = vmul.f32 %v348, %v1586
  %v1629 = vmul.f32 %v352, %v1588
  %v1630 = vmul.f32 %v366, %v1604
  %v1631 = vmul.f32 %v370, %v1605
  %v1632 = vmul.f32 %v366, %v1602
  %v1633 = vmul.f32 %v370, %v1603
  %v1634 = vmul.f32 %v366, %v1600
  %v1635 = vmul.f32 %v370, %v1601
  %v1636 = vmul.f32 %v366, %v1598
  %v1637 = vmul.f32 %v370, %v1599
  %v1638 = vadd.f32 %v1622, %v1630
  %v1639 = vadd.f32 %v1623, %v1631
  %v1640 = vadd.f32 %v1624, %v1632
  %v1641 = vadd.f32 %v1625, %v1633
  %v1642 = vadd.f32 %v1626, %v1634
  %v1643 = vadd.f32 %v1627, %v1635
  %v1644 = vadd.f32 %v1628, %v1636
  %v1645 = vadd.f32 %v1629, %v1637
  %v1646 = vmul.f32 %v366, %v1618
  %v1647 = vmul.f32 %v370, %v1619
  %v1648 = vmul.f32 %v366, %v1616
  %v1649 = vmul.f32 %v370, %v1617
  %v1650 = vmul.f32 %v366, %v1614
  %v1651 = vmul.f32 %v370, %v1615
  %v1652 = vmul.f32 %v366, %v1620
  %v1653 = vmul.f32 %v370, %v1621
  %v1654 = vsub.f32 %v1622, %v1646
  %v1655 = vsub.f32 %v1623, %v1647
  %v1656 = vsub.f32 %v1624, %v1648
  %v1657 = vsub.f32 %v1625, %v1649
  %v1658 = vsub.f32 %v1626, %v1650
  %v1659 = vsub.f32 %v1627, %v1651
  %v1660 = vsub.f32 %v1628, %v1652
  %v1661 = vsub.f32 %v1629, %v1653
  %v1662 = vsel %vm938, %v1638, %v1654
  %v1663 = vsel %vm938, %v1639, %v1655
  %v1664 = vsel %vm939, %v1640, %v1656
  %v1665 = vsel %vm939, %v1641, %v1657
  %v1666 = vsel %vm940, %v1642, %v1658
  %v1667 = vsel %vm940, %v1643, %v1659
  %v1668 = vsel %vm941, %v1644, %v1660
  %v1669 = vsel %vm941, %v1645, %v1661
  %s1670 = scalar_lea.vmem %s1, 224
  %v1671 = vld [vmem:[%s1670] sm:$0xff]
  %v1672 = vld [vmem:[%s1670 + $0x8] sm:$0xff]
  %v1673 = vld [vmem:[%s1670 + $0x10] sm:$0xff]
  %v1674 = vld [vmem:[%s1670 + $0x18] sm:$0xff]
  %v1676 = vsel %vm431, %v1671, 0
  %v1679 = vsel %vm431, %v1672, 0
  %v1682 = vsel %vm431, %v1673, 0
  %v1685 = vsel %vm431, %v1674, 0
  %1687 = vmatprep.subr.mxu0 %v1663
  %1688 = vmatpush1.msra.mxu0 %v1662
  %1689 = vmatprep.subr.mxu0 %v1665
  %1690 = vmatpush1.msra.mxu0 %v1664
  %1691 = vmatprep.subr.mxu0 %v1667
  %1692 = vmatpush1.msra.mxu0 %v1666
  %1693 = vmatprep.subr.mxu0 %v1669
  %1694 = vmatpush1.msra.mxu0 %v1668
  %1695 = vmatprep.subr.mxu0 0.0
  %1696 = vmatpush1.msra.mxu0 0.0
  %1697 = vmatprep.subr.mxu0 0.0
  %1698 = vmatpush1.msra.mxu0 0.0
  %1699 = vmatprep.subr.mxu0 0.0
  %1700 = vmatpush1.msra.mxu0 0.0
  %1701 = vmatprep.subr.mxu0 0.0
  %1702 = vmatpush1.msra.mxu0 0.0
  %1703 = vmatprep.subr.mxu0 0.0
  %1704 = vmatpush1.msra.mxu0 0.0
  %1705 = vmatprep.subr.mxu0 0.0
  %1706 = vmatpush1.msra.mxu0 0.0
  %1707 = vmatprep.subr.mxu0 0.0
  %1708 = vmatpush1.msra.mxu0 0.0
  %1709 = vmatprep.subr.mxu0 0.0
  %1710 = vmatpush1.msra.mxu0 0.0
  %1711 = vmatprep.subr.mxu0 0.0
  %1712 = vmatpush1.msra.mxu0 0.0
  %1713 = vmatprep.subr.mxu0 0.0
  %1714 = vmatpush1.msra.mxu0 0.0
  %1715 = vmatprep.subr.mxu0 0.0
  %1716 = vmatpush1.msra.mxu0 0.0
  %1717 = vmatprep.subr.mxu0 0.0
  %1718 = vmatpush1.msra.mxu0 0.0
  %1719 = vmatprep.subr.mxu0 0.0
  %1720 = vmatpush1.msra.mxu0 0.0
  %1721 = vmatprep.subr.mxu0 0.0
  %1722 = vmatpush1.msra.mxu0 0.0
  %1723 = vmatprep.subr.mxu0 0.0
  %1724 = vmatpush1.msra.mxu0 0.0
  %1725 = vmatprep.subr.mxu0 0.0
  %1726 = vmatpush1.msra.mxu0 0.0
  %1727 = vmatprep.subr.mxu0 0.0
  %1728 = vmatpush1.msra.mxu0 0.0
  %1729 = vmatprep.subr.mxu0 0.0
  %1730 = vmatpush1.msra.mxu0 0.0
  %1731 = vmatprep.subr.mxu0 0.0
  %1732 = vmatpush1.msra.mxu0 0.0
  %1733 = vmatprep.subr.mxu0 0.0
  %1734 = vmatpush1.msra.mxu0 0.0
  %1735 = vmatprep.subr.mxu0 0.0
  %1736 = vmatpush1.msra.mxu0 0.0
  %1737 = vmatprep.subr.mxu0 0.0
  %1738 = vmatpush1.msra.mxu0 0.0
  %1739 = vmatprep.subr.mxu0 0.0
  %1740 = vmatpush1.msra.mxu0 0.0
  %1741 = vmatprep.subr.mxu0 0.0
  %1742 = vmatpush1.msra.mxu0 0.0
  %1743 = vmatprep.subr.mxu0 0.0
  %1744 = vmatpush1.msra.mxu0 0.0
  %1745 = vmatprep.subr.mxu0 0.0
  %1746 = vmatpush1.msra.mxu0 0.0
  %1747 = vmatprep.subr.mxu0 0.0
  %1748 = vmatpush1.msra.mxu0 0.0
  %1749 = vmatprep.subr.mxu0 0.0
  %1750 = vmatpush1.msra.mxu0 0.0
  %1751 = vmatprep.mubr.f32.mxu0 0.0
  %1752 = vmatmul.mubr.f32.gmra.mrb[0].mxu0 %v1676
  %v1753 = vpop.f32.mrb[0].mxu0
  %v1754 = vadd.f32 0.0, %v1753
  %v1755 = vpop.f32.mrb[0].mxu0
  %v1756 = vadd.f32 0.0, %v1755
  %1757 = vmatprep.mubr.f32.mxu0 0.0
  %1758 = vmatmul.mubr.f32.gmra.mrb[0].mxu0 %v1679
  %v1759 = vpop.f32.mrb[0].mxu0
  %v1760 = vadd.f32 0.0, %v1759
  %v1761 = vpop.f32.mrb[0].mxu0
  %v1762 = vadd.f32 0.0, %v1761
  %1763 = vmatprep.mubr.f32.mxu0 0.0
  %1764 = vmatmul.mubr.f32.gmra.mrb[0].mxu0 %v1682
  %v1765 = vpop.f32.mrb[0].mxu0
  %v1766 = vadd.f32 0.0, %v1765
  %v1767 = vpop.f32.mrb[0].mxu0
  %v1768 = vadd.f32 0.0, %v1767
  %1769 = vmatprep.mubr.f32.mxu0 0.0
  %1770 = vmatmul.mubr.f32.gmra.mrb[0].mxu0 %v1685
  %v1771 = vpop.f32.mrb[0].mxu0
  %v1772 = vadd.f32 0.0, %v1771
  %v1773 = vpop.f32.mrb[0].mxu0
  %v1774 = vadd.f32 0.0, %v1773
  %1775 = vdwg.mxu0
  %v1776 = vmul.f32 %v135, %v1754
  %v1777 = vmul.f32 %v139, %v1756
  %v1778 = vmul.f32 %v135, %v1760
  %v1779 = vmul.f32 %v139, %v1762
  %v1780 = vmul.f32 %v135, %v1766
  %v1781 = vmul.f32 %v139, %v1768
  %v1782 = vmul.f32 %v135, %v1772
  %v1783 = vmul.f32 %v139, %v1774
  %v1784 = vmul.f32 %v258, %v1772
  %v1785 = vmul.f32 %v262, %v1774
  %v1786 = vmul.f32 %v258, %v1754
  %v1787 = vmul.f32 %v262, %v1756
  %v1788 = vmul.f32 %v258, %v1760
  %v1789 = vmul.f32 %v262, %v1762
  %v1790 = vmul.f32 %v258, %v1766
  %v1791 = vmul.f32 %v262, %v1768
  %v1792 = vadd.f32 %v1776, %v1784
  %v1793 = vadd.f32 %v1777, %v1785
  %v1794 = vadd.f32 %v1778, %v1786
  %v1795 = vadd.f32 %v1779, %v1787
  %v1796 = vadd.f32 %v1780, %v1788
  %v1797 = vadd.f32 %v1781, %v1789
  %v1798 = vadd.f32 %v1782, %v1790
  %v1799 = vadd.f32 %v1783, %v1791
  %v1800 = vsub.f32 %v1776, %v1788
  %v1801 = vsub.f32 %v1777, %v1789
  %v1802 = vsub.f32 %v1778, %v1790
  %v1803 = vsub.f32 %v1779, %v1791
  %v1804 = vsub.f32 %v1780, %v1784
  %v1805 = vsub.f32 %v1781, %v1785
  %v1806 = vsub.f32 %v1782, %v1786
  %v1807 = vsub.f32 %v1783, %v1787
  %v1808 = vsel %vm383, %v1792, %v1800
  %v1809 = vsel %vm383, %v1793, %v1801
  %v1810 = vsel %vm384, %v1794, %v1802
  %v1811 = vsel %vm384, %v1795, %v1803
  %v1812 = vsel %vm385, %v1796, %v1804
  %v1813 = vsel %vm385, %v1797, %v1805
  %v1814 = vsel %vm386, %v1798, %v1806
  %v1815 = vsel %vm386, %v1799, %v1807
  %s1816 = scalar_lea.vmem %s1, 256
  %v1817 = vld [vmem:[%s1816] sm:$0xff]
  %v1818 = vld [vmem:[%s1816 + $0x8] sm:$0xff]
  %v1819 = vld [vmem:[%s1816 + $0x10] sm:$0xff]
  %v1820 = vld [vmem:[%s1816 + $0x18] sm:$0xff]
  %v1822 = vsel %vm431, %v1817, 0
  %v1825 = vsel %vm431, %v1818, 0
  %v1828 = vsel %vm431, %v1819, 0
  %v1831 = vsel %vm431, %v1820, 0
  %1833 = vmatprep.subr.mxu0 %v1809
  %1834 = vmatpush1.msra.mxu0 %v1808
  %1835 = vmatprep.subr.mxu0 %v1811
  %1836 = vmatpush1.msra.mxu0 %v1810
  %1837 = vmatprep.subr.mxu0 %v1813
  %1838 = vmatpush1.msra.mxu0 %v1812
  %1839 = vmatprep.subr.mxu0 %v1815
  %1840 = vmatpush1.msra.mxu0 %v1814
  %1841 = vmatprep.subr.mxu0 0.0
  %1842 = vmatpush1.msra.mxu0 0.0
  %1843 = vmatprep.subr.mxu0 0.0
  %1844 = vmatpush1.msra.mxu0 0.0
  %1845 = vmatprep.subr.mxu0 0.0
  %1846 = vmatpush1.msra.mxu0 0.0
  %1847 = vmatprep.subr.mxu0 0.0
  %1848 = vmatpush1.msra.mxu0 0.0
  %1849 = vmatprep.subr.mxu0 0.0
  %1850 = vmatpush1.msra.mxu0 0.0
  %1851 = vmatprep.subr.mxu0 0.0
  %1852 = vmatpush1.msra.mxu0 0.0
  %1853 = vmatprep.subr.mxu0 0.0
  %1854 = vmatpush1.msra.mxu0 0.0
  %1855 = vmatprep.subr.mxu0 0.0
  %1856 = vmatpush1.msra.mxu0 0.0
  %1857 = vmatprep.subr.mxu0 0.0
  %1858 = vmatpush1.msra.mxu0 0.0
  %1859 = vmatprep.subr.mxu0 0.0
  %1860 = vmatpush1.msra.mxu0 0.0
  %1861 = vmatprep.subr.mxu0 0.0
  %1862 = vmatpush1.msra.mxu0 0.0
  %1863 = vmatprep.subr.mxu0 0.0
  %1864 = vmatpush1.msra.mxu0 0.0
  %1865 = vmatprep.subr.mxu0 0.0
  %1866 = vmatpush1.msra.mxu0 0.0
  %1867 = vmatprep.subr.mxu0 0.0
  %1868 = vmatpush1.msra.mxu0 0.0
  %1869 = vmatprep.subr.mxu0 0.0
  %1870 = vmatpush1.msra.mxu0 0.0
  %1871 = vmatprep.subr.mxu0 0.0
  %1872 = vmatpush1.msra.mxu0 0.0
  %1873 = vmatprep.subr.mxu0 0.0
  %1874 = vmatpush1.msra.mxu0 0.0
  %1875 = vmatprep.subr.mxu0 0.0
  %1876 = vmatpush1.msra.mxu0 0.0
  %1877 = vmatprep.subr.mxu0 0.0
  %1878 = vmatpush1.msra.mxu0 0.0
  %1879 = vmatprep.subr.mxu0 0.0
  %1880 = vmatpush1.msra.mxu0 0.0
  %1881 = vmatprep.subr.mxu0 0.0
  %1882 = vmatpush1.msra.mxu0 0.0
  %1883 = vmatprep.subr.mxu0 0.0
  %1884 = vmatpush1.msra.mxu0 0.0
  %1885 = vmatprep.subr.mxu0 0.0
  %1886 = vmatpush1.msra.mxu0 0.0
  %1887 = vmatprep.subr.mxu0 0.0
  %1888 = vmatpush1.msra.mxu0 0.0
  %1889 = vmatprep.subr.mxu0 0.0
  %1890 = vmatpush1.msra.mxu0 0.0
  %1891 = vmatprep.subr.mxu0 0.0
  %1892 = vmatpush1.msra.mxu0 0.0
  %1893 = vmatprep.subr.mxu0 0.0
  %1894 = vmatpush1.msra.mxu0 0.0
  %1895 = vmatprep.subr.mxu0 0.0
  %1896 = vmatpush1.msra.mxu0 0.0
  %1897 = vmatprep.mubr.f32.mxu0 0.0
  %1898 = vmatmul.mubr.f32.gmra.mrb[0].mxu0 %v1822
  %v1899 = vpop.f32.mrb[0].mxu0
  %v1900 = vadd.f32 0.0, %v1899
  %v1901 = vpop.f32.mrb[0].mxu0
  %v1902 = vadd.f32 0.0, %v1901
  %1903 = vmatprep.mubr.f32.mxu0 0.0
  %1904 = vmatmul.mubr.f32.gmra.mrb[0].mxu0 %v1825
  %v1905 = vpop.f32.mrb[0].mxu0
  %v1906 = vadd.f32 0.0, %v1905
  %v1907 = vpop.f32.mrb[0].mxu0
  %v1908 = vadd.f32 0.0, %v1907
  %1909 = vmatprep.mubr.f32.mxu0 0.0
  %1910 = vmatmul.mubr.f32.gmra.mrb[0].mxu0 %v1828
  %v1911 = vpop.f32.mrb[0].mxu0
  %v1912 = vadd.f32 0.0, %v1911
  %v1913 = vpop.f32.mrb[0].mxu0
  %v1914 = vadd.f32 0.0, %v1913
  %1915 = vmatprep.mubr.f32.mxu0 0.0
  %1916 = vmatmul.mubr.f32.gmra.mrb[0].mxu0 %v1831
  %v1917 = vpop.f32.mrb[0].mxu0
  %v1918 = vadd.f32 0.0, %v1917
  %v1919 = vpop.f32.mrb[0].mxu0
  %v1920 = vadd.f32 0.0, %v1919
  %1921 = vdwg.mxu0
  %v1922 = vrot.slane %v1900, 6
  %v1923 = vrot.slane %v1902, 6
  %v1924 = vrot.slane %v1906, 6
  %v1925 = vrot.slane %v1908, 6
  %v1926 = vrot.slane %v1912, 6
  %v1927 = vrot.slane %v1914, 6
  %v1928 = vrot.slane %v1918, 6
  %v1929 = vrot.slane %v1920, 6
  %v1930 = vsel %vm541, %v1926, %v1928
  %v1931 = vsel %vm541, %v1927, %v1929
  %v1932 = vsel %vm541, %v1924, %v1926
  %v1933 = vsel %vm541, %v1925, %v1927
  %v1934 = vsel %vm541, %v1922, %v1924
  %v1935 = vsel %vm541, %v1923, %v1925
  %v1936 = vsel %vm541, %v1928, %v1922
  %v1937 = vsel %vm541, %v1929, %v1923
  %v1938 = vrot.slane %v1900, 2
  %v1939 = vrot.slane %v1902, 2
  %v1940 = vrot.slane %v1906, 2
  %v1941 = vrot.slane %v1908, 2
  %v1942 = vrot.slane %v1912, 2
  %v1943 = vrot.slane %v1914, 2
  %v1944 = vrot.slane %v1918, 2
  %v1945 = vrot.slane %v1920, 2
  %v1946 = vsel %vm558, %v1942, %v1944
  %v1947 = vsel %vm558, %v1943, %v1945
  %v1948 = vsel %vm558, %v1940, %v1942
  %v1949 = vsel %vm558, %v1941, %v1943
  %v1950 = vsel %vm558, %v1938, %v1940
  %v1951 = vsel %vm558, %v1939, %v1941
  %v1952 = vsel %vm558, %v1944, %v1938
  %v1953 = vsel %vm558, %v1945, %v1939
  %v1954 = vmul.f32 %v312, %v1900
  %v1955 = vmul.f32 %v316, %v1902
  %v1956 = vmul.f32 %v312, %v1906
  %v1957 = vmul.f32 %v316, %v1908
  %v1958 = vmul.f32 %v312, %v1912
  %v1959 = vmul.f32 %v316, %v1914
  %v1960 = vmul.f32 %v312, %v1918
  %v1961 = vmul.f32 %v316, %v1920
  %v1962 = vmul.f32 %v330, %v1936
  %v1963 = vmul.f32 %v334, %v1937
  %v1964 = vmul.f32 %v330, %v1934
  %v1965 = vmul.f32 %v334, %v1935
  %v1966 = vmul.f32 %v330, %v1932
  %v1967 = vmul.f32 %v334, %v1933
  %v1968 = vmul.f32 %v330, %v1930
  %v1969 = vmul.f32 %v334, %v1931
  %v1970 = vadd.f32 %v1954, %v1962
  %v1971 = vadd.f32 %v1955, %v1963
  %v1972 = vadd.f32 %v1956, %v1964
  %v1973 = vadd.f32 %v1957, %v1965
  %v1974 = vadd.f32 %v1958, %v1966
  %v1975 = vadd.f32 %v1959, %v1967
  %v1976 = vadd.f32 %v1960, %v1968
  %v1977 = vadd.f32 %v1961, %v1969
  %v1978 = vmul.f32 %v330, %v1950
  %v1979 = vmul.f32 %v334, %v1951
  %v1980 = vmul.f32 %v330, %v1948
  %v1981 = vmul.f32 %v334, %v1949
  %v1982 = vmul.f32 %v330, %v1946
  %v1983 = vmul.f32 %v334, %v1947
  %v1984 = vmul.f32 %v330, %v1952
  %v1985 = vmul.f32 %v334, %v1953
  %v1986 = vsub.f32 %v1954, %v1978
  %v1987 = vsub.f32 %v1955, %v1979
  %v1988 = vsub.f32 %v1956, %v1980
  %v1989 = vsub.f32 %v1957, %v1981
  %v1990 = vsub.f32 %v1958, %v1982
  %v1991 = vsub.f32 %v1959, %v1983
  %v1992 = vsub.f32 %v1960, %v1984
  %v1993 = vsub.f32 %v1961, %v1985
  %v1994 = vsel %vm571, %v1970, %v1986
  %v1995 = vsel %vm571, %v1971, %v1987
  %v1996 = vsel %vm572, %v1972, %v1988
  %v1997 = vsel %vm572, %v1973, %v1989
  %v1998 = vsel %vm573, %v1974, %v1990
  %v1999 = vsel %vm573, %v1975, %v1991
  %v2000 = vsel %vm574, %v1976, %v1992
  %v2001 = vsel %vm574, %v1977, %v1993
  %s2002 = scalar_lea.vmem %s1, 288
  %v2003 = vld [vmem:[%s2002] sm:$0xff]
  %v2004 = vld [vmem:[%s2002 + $0x8] sm:$0xff]
  %v2005 = vld [vmem:[%s2002 + $0x10] sm:$0xff]
  %v2006 = vld [vmem:[%s2002 + $0x18] sm:$0xff]
  %v2008 = vsel %vm431, %v2003, 0
  %v2011 = vsel %vm431, %v2004, 0
  %v2014 = vsel %vm431, %v2005, 0
  %v2017 = vsel %vm431, %v2006, 0
  %2019 = vmatprep.subr.mxu0 %v1995
  %2020 = vmatpush1.msra.mxu0 %v1994
  %2021 = vmatprep.subr.mxu0 %v1997
  %2022 = vmatpush1.msra.mxu0 %v1996
  %2023 = vmatprep.subr.mxu0 %v1999
  %2024 = vmatpush1.msra.mxu0 %v1998
  %2025 = vmatprep.subr.mxu0 %v2001
  %2026 = vmatpush1.msra.mxu0 %v2000
  %2027 = vmatprep.subr.mxu0 0.0
  %2028 = vmatpush1.msra.mxu0 0.0
  %2029 = vmatprep.subr.mxu0 0.0
  %2030 = vmatpush1.msra.mxu0 0.0
  %2031 = vmatprep.subr.mxu0 0.0
  %2032 = vmatpush1.msra.mxu0 0.0
  %2033 = vmatprep.subr.mxu0 0.0
  %2034 = vmatpush1.msra.mxu0 0.0
  %2035 = vmatprep.subr.mxu0 0.0
  %2036 = vmatpush1.msra.mxu0 0.0
  %2037 = vmatprep.subr.mxu0 0.0
  %2038 = vmatpush1.msra.mxu0 0.0
  %2039 = vmatprep.subr.mxu0 0.0
  %2040 = vmatpush1.msra.mxu0 0.0
  %2041 = vmatprep.subr.mxu0 0.0
  %2042 = vmatpush1.msra.mxu0 0.0
  %2043 = vmatprep.subr.mxu0 0.0
  %2044 = vmatpush1.msra.mxu0 0.0
  %2045 = vmatprep.subr.mxu0 0.0
  %2046 = vmatpush1.msra.mxu0 0.0
  %2047 = vmatprep.subr.mxu0 0.0
  %2048 = vmatpush1.msra.mxu0 0.0
  %2049 = vmatprep.subr.mxu0 0.0
  %2050 = vmatpush1.msra.mxu0 0.0
  %2051 = vmatprep.subr.mxu0 0.0
  %2052 = vmatpush1.msra.mxu0 0.0
  %2053 = vmatprep.subr.mxu0 0.0
  %2054 = vmatpush1.msra.mxu0 0.0
  %2055 = vmatprep.subr.mxu0 0.0
  %2056 = vmatpush1.msra.mxu0 0.0
  %2057 = vmatprep.subr.mxu0 0.0
  %2058 = vmatpush1.msra.mxu0 0.0
  %2059 = vmatprep.subr.mxu0 0.0
  %2060 = vmatpush1.msra.mxu0 0.0
  %2061 = vmatprep.subr.mxu0 0.0
  %2062 = vmatpush1.msra.mxu0 0.0
  %2063 = vmatprep.subr.mxu0 0.0
  %2064 = vmatpush1.msra.mxu0 0.0
  %2065 = vmatprep.subr.mxu0 0.0
  %2066 = vmatpush1.msra.mxu0 0.0
  %2067 = vmatprep.subr.mxu0 0.0
  %2068 = vmatpush1.msra.mxu0 0.0
  %2069 = vmatprep.subr.mxu0 0.0
  %2070 = vmatpush1.msra.mxu0 0.0
  %2071 = vmatprep.subr.mxu0 0.0
  %2072 = vmatpush1.msra.mxu0 0.0
  %2073 = vmatprep.subr.mxu0 0.0
  %2074 = vmatpush1.msra.mxu0 0.0
  %2075 = vmatprep.subr.mxu0 0.0
  %2076 = vmatpush1.msra.mxu0 0.0
  %2077 = vmatprep.subr.mxu0 0.0
  %2078 = vmatpush1.msra.mxu0 0.0
  %2079 = vmatprep.subr.mxu0 0.0
  %2080 = vmatpush1.msra.mxu0 0.0
  %2081 = vmatprep.subr.mxu0 0.0
  %2082 = vmatpush1.msra.mxu0 0.0
  %2083 = vmatprep.mubr.f32.mxu0 0.0
  %2084 = vmatmul.mubr.f32.gmra.mrb[0].mxu0 %v2008
  %v2085 = vpop.f32.mrb[0].mxu0
  %v2086 = vadd.f32 0.0, %v2085
  %v2087 = vpop.f32.mrb[0].mxu0
  %v2088 = vadd.f32 0.0, %v2087
  %2089 = vmatprep.mubr.f32.mxu0 0.0
  %2090 = vmatmul.mubr.f32.gmra.mrb[0].mxu0 %v2011
  %v2091 = vpop.f32.mrb[0].mxu0
  %v2092 = vadd.f32 0.0, %v2091
  %v2093 = vpop.f32.mrb[0].mxu0
  %v2094 = vadd.f32 0.0, %v2093
  %2095 = vmatprep.mubr.f32.mxu0 0.0
  %2096 = vmatmul.mubr.f32.gmra.mrb[0].mxu0 %v2014
  %v2097 = vpop.f32.mrb[0].mxu0
  %v2098 = vadd.f32 0.0, %v2097
  %v2099 = vpop.f32.mrb[0].mxu0
  %v2100 = vadd.f32 0.0, %v2099
  %2101 = vmatprep.mubr.f32.mxu0 0.0
  %2102 = vmatmul.mubr.f32.gmra.mrb[0].mxu0 %v2017
  %v2103 = vpop.f32.mrb[0].mxu0
  %v2104 = vadd.f32 0.0, %v2103
  %v2105 = vpop.f32.mrb[0].mxu0
  %v2106 = vadd.f32 0.0, %v2105
  %2107 = vdwg.mxu0
  %v2108 = vrot.slane %v2086, 4
  %v2109 = vrot.slane %v2088, 4
  %v2110 = vrot.slane %v2092, 4
  %v2111 = vrot.slane %v2094, 4
  %v2112 = vrot.slane %v2098, 4
  %v2113 = vrot.slane %v2100, 4
  %v2114 = vrot.slane %v2104, 4
  %v2115 = vrot.slane %v2106, 4
  %v2116 = vsel %vm737, %v2112, %v2114
  %v2117 = vsel %vm737, %v2113, %v2115
  %v2118 = vsel %vm737, %v2110, %v2112
  %v2119 = vsel %vm737, %v2111, %v2113
  %v2120 = vsel %vm737, %v2108, %v2110
  %v2121 = vsel %vm737, %v2109, %v2111
  %v2122 = vsel %vm737, %v2114, %v2108
  %v2123 = vsel %vm737, %v2115, %v2109
  %v2124 = vmul.f32 %v276, %v2086
  %v2125 = vmul.f32 %v280, %v2088
  %v2126 = vmul.f32 %v276, %v2092
  %v2127 = vmul.f32 %v280, %v2094
  %v2128 = vmul.f32 %v276, %v2098
  %v2129 = vmul.f32 %v280, %v2100
  %v2130 = vmul.f32 %v276, %v2104
  %v2131 = vmul.f32 %v280, %v2106
  %v2132 = vmul.f32 %v294, %v2122
  %v2133 = vmul.f32 %v298, %v2123
  %v2134 = vmul.f32 %v294, %v2120
  %v2135 = vmul.f32 %v298, %v2121
  %v2136 = vmul.f32 %v294, %v2118
  %v2137 = vmul.f32 %v298, %v2119
  %v2138 = vmul.f32 %v294, %v2116
  %v2139 = vmul.f32 %v298, %v2117
  %v2140 = vadd.f32 %v2124, %v2132
  %v2141 = vadd.f32 %v2125, %v2133
  %v2142 = vadd.f32 %v2126, %v2134
  %v2143 = vadd.f32 %v2127, %v2135
  %v2144 = vadd.f32 %v2128, %v2136
  %v2145 = vadd.f32 %v2129, %v2137
  %v2146 = vadd.f32 %v2130, %v2138
  %v2147 = vadd.f32 %v2131, %v2139
  %v2148 = vsub.f32 %v2124, %v2134
  %v2149 = vsub.f32 %v2125, %v2135
  %v2150 = vsub.f32 %v2126, %v2136
  %v2151 = vsub.f32 %v2127, %v2137
  %v2152 = vsub.f32 %v2128, %v2138
  %v2153 = vsub.f32 %v2129, %v2139
  %v2154 = vsub.f32 %v2130, %v2132
  %v2155 = vsub.f32 %v2131, %v2133
  %v2156 = vsel %vm750, %v2140, %v2148
  %v2157 = vsel %vm750, %v2141, %v2149
  %v2158 = vsel %vm751, %v2142, %v2150
  %v2159 = vsel %vm751, %v2143, %v2151
  %v2160 = vsel %vm752, %v2144, %v2152
  %v2161 = vsel %vm752, %v2145, %v2153
  %v2162 = vsel %vm753, %v2146, %v2154
  %v2163 = vsel %vm753, %v2147, %v2155
  %s2164 = scalar_lea.vmem %s1, 320
  %v2165 = vld [vmem:[%s2164] sm:$0xff]
  %v2166 = vld [vmem:[%s2164 + $0x8] sm:$0xff]
  %v2167 = vld [vmem:[%s2164 + $0x10] sm:$0xff]
  %v2168 = vld [vmem:[%s2164 + $0x18] sm:$0xff]
  %v2170 = vsel %vm431, %v2165, 0
  %v2173 = vsel %vm431, %v2166, 0
  %v2176 = vsel %vm431, %v2167, 0
  %v2179 = vsel %vm431, %v2168, 0
  %2181 = vmatprep.subr.mxu0 %v2157
  %2182 = vmatpush1.msra.mxu0 %v2156
  %2183 = vmatprep.subr.mxu0 %v2159
  %2184 = vmatpush1.msra.mxu0 %v2158
  %2185 = vmatprep.subr.mxu0 %v2161
  %2186 = vmatpush1.msra.mxu0 %v2160
  %2187 = vmatprep.subr.mxu0 %v2163
  %2188 = vmatpush1.msra.mxu0 %v2162
  %2189 = vmatprep.subr.mxu0 0.0
  %2190 = vmatpush1.msra.mxu0 0.0
  %2191 = vmatprep.subr.mxu0 0.0
  %2192 = vmatpush1.msra.mxu0 0.0
  %2193 = vmatprep.subr.mxu0 0.0
  %2194 = vmatpush1.msra.mxu0 0.0
  %2195 = vmatprep.subr.mxu0 0.0
  %2196 = vmatpush1.msra.mxu0 0.0
  %2197 = vmatprep.subr.mxu0 0.0
  %2198 = vmatpush1.msra.mxu0 0.0
  %2199 = vmatprep.subr.mxu0 0.0
  %2200 = vmatpush1.msra.mxu0 0.0
  %2201 = vmatprep.subr.mxu0 0.0
  %2202 = vmatpush1.msra.mxu0 0.0
  %2203 = vmatprep.subr.mxu0 0.0
  %2204 = vmatpush1.msra.mxu0 0.0
  %2205 = vmatprep.subr.mxu0 0.0
  %2206 = vmatpush1.msra.mxu0 0.0
  %2207 = vmatprep.subr.mxu0 0.0
  %2208 = vmatpush1.msra.mxu0 0.0
  %2209 = vmatprep.subr.mxu0 0.0
  %2210 = vmatpush1.msra.mxu0 0.0
  %2211 = vmatprep.subr.mxu0 0.0
  %2212 = vmatpush1.msra.mxu0 0.0
  %2213 = vmatprep.subr.mxu0 0.0
  %2214 = vmatpush1.msra.mxu0 0.0
  %2215 = vmatprep.subr.mxu0 0.0
  %2216 = vmatpush1.msra.mxu0 0.0
  %2217 = vmatprep.subr.mxu0 0.0
  %2218 = vmatpush1.msra.mxu0 0.0
  %2219 = vmatprep.subr.mxu0 0.0
  %2220 = vmatpush1.msra.mxu0 0.0
  %2221 = vmatprep.subr.mxu0 0.0
  %2222 = vmatpush1.msra.mxu0 0.0
  %2223 = vmatprep.subr.mxu0 0.0
  %2224 = vmatpush1.msra.mxu0 0.0
  %2225 = vmatprep.subr.mxu0 0.0
  %2226 = vmatpush1.msra.mxu0 0.0
  %2227 = vmatprep.subr.mxu0 0.0
  %2228 = vmatpush1.msra.mxu0 0.0
  %2229 = vmatprep.subr.mxu0 0.0
  %2230 = vmatpush1.msra.mxu0 0.0
  %2231 = vmatprep.subr.mxu0 0.0
  %2232 = vmatpush1.msra.mxu0 0.0
  %2233 = vmatprep.subr.mxu0 0.0
  %2234 = vmatpush1.msra.mxu0 0.0
  %2235 = vmatprep.subr.mxu0 0.0
  %2236 = vmatpush1.msra.mxu0 0.0
  %2237 = vmatprep.subr.mxu0 0.0
  %2238 = vmatpush1.msra.mxu0 0.0
  %2239 = vmatprep.subr.mxu0 0.0
  %2240 = vmatpush1.msra.mxu0 0.0
  %2241 = vmatprep.subr.mxu0 0.0
  %2242 = vmatpush1.msra.mxu0 0.0
  %2243 = vmatprep.subr.mxu0 0.0
  %2244 = vmatpush1.msra.mxu0 0.0
  %2245 = vmatprep.mubr.f32.mxu0 0.0
  %2246 = vmatmul.mubr.f32.gmra.mrb[0].mxu0 %v2170
  %v2247 = vpop.f32.mrb[0].mxu0
  %v2248 = vadd.f32 0.0, %v2247
  %v2249 = vpop.f32.mrb[0].mxu0
  %v2250 = vadd.f32 0.0, %v2249
  %2251 = vmatprep.mubr.f32.mxu0 0.0
  %2252 = vmatmul.mubr.f32.gmra.mrb[0].mxu0 %v2173
  %v2253 = vpop.f32.mrb[0].mxu0
  %v2254 = vadd.f32 0.0, %v2253
  %v2255 = vpop.f32.mrb[0].mxu0
  %v2256 = vadd.f32 0.0, %v2255
  %2257 = vmatprep.mubr.f32.mxu0 0.0
  %2258 = vmatmul.mubr.f32.gmra.mrb[0].mxu0 %v2176
  %v2259 = vpop.f32.mrb[0].mxu0
  %v2260 = vadd.f32 0.0, %v2259
  %v2261 = vpop.f32.mrb[0].mxu0
  %v2262 = vadd.f32 0.0, %v2261
  %2263 = vmatprep.mubr.f32.mxu0 0.0
  %2264 = vmatmul.mubr.f32.gmra.mrb[0].mxu0 %v2179
  %v2265 = vpop.f32.mrb[0].mxu0
  %v2266 = vadd.f32 0.0, %v2265
  %v2267 = vpop.f32.mrb[0].mxu0
  %v2268 = vadd.f32 0.0, %v2267
  %2269 = vdwg.mxu0
  %v2270 = vrot.slane %v2248, 7
  %v2271 = vrot.slane %v2250, 7
  %v2272 = vrot.slane %v2254, 7
  %v2273 = vrot.slane %v2256, 7
  %v2274 = vrot.slane %v2260, 7
  %v2275 = vrot.slane %v2262, 7
  %v2276 = vrot.slane %v2266, 7
  %v2277 = vrot.slane %v2268, 7
  %v2278 = vsel %vm908, %v2274, %v2276
  %v2279 = vsel %vm908, %v2275, %v2277
  %v2280 = vsel %vm908, %v2272, %v2274
  %v2281 = vsel %vm908, %v2273, %v2275
  %v2282 = vsel %vm908, %v2270, %v2272
  %v2283 = vsel %vm908, %v2271, %v2273
  %v2284 = vsel %vm908, %v2276, %v2270
  %v2285 = vsel %vm908, %v2277, %v2271
  %v2286 = vrot.slane %v2248, 1
  %v2287 = vrot.slane %v2250, 1
  %v2288 = vrot.slane %v2254, 1
  %v2289 = vrot.slane %v2256, 1
  %v2290 = vrot.slane %v2260, 1
  %v2291 = vrot.slane %v2262, 1
  %v2292 = vrot.slane %v2266, 1
  %v2293 = vrot.slane %v2268, 1
  %v2294 = vsel %vm925, %v2290, %v2292
  %v2295 = vsel %vm925, %v2291, %v2293
  %v2296 = vsel %vm925, %v2288, %v2290
  %v2297 = vsel %vm925, %v2289, %v2291
  %v2298 = vsel %vm925, %v2286, %v2288
  %v2299 = vsel %vm925, %v2287, %v2289
  %v2300 = vsel %vm925, %v2292, %v2286
  %v2301 = vsel %vm925, %v2293, %v2287
  %v2302 = vmul.f32 %v348, %v2248
  %v2303 = vmul.f32 %v352, %v2250
  %v2304 = vmul.f32 %v348, %v2254
  %v2305 = vmul.f32 %v352, %v2256
  %v2306 = vmul.f32 %v348, %v2260
  %v2307 = vmul.f32 %v352, %v2262
  %v2308 = vmul.f32 %v348, %v2266
  %v2309 = vmul.f32 %v352, %v2268
  %v2310 = vmul.f32 %v366, %v2284
  %v2311 = vmul.f32 %v370, %v2285
  %v2312 = vmul.f32 %v366, %v2282
  %v2313 = vmul.f32 %v370, %v2283
  %v2314 = vmul.f32 %v366, %v2280
  %v2315 = vmul.f32 %v370, %v2281
  %v2316 = vmul.f32 %v366, %v2278
  %v2317 = vmul.f32 %v370, %v2279
  %v2318 = vadd.f32 %v2302, %v2310
  %v2319 = vadd.f32 %v2303, %v2311
  %v2320 = vadd.f32 %v2304, %v2312
  %v2321 = vadd.f32 %v2305, %v2313
  %v2322 = vadd.f32 %v2306, %v2314
  %v2323 = vadd.f32 %v2307, %v2315
  %v2324 = vadd.f32 %v2308, %v2316
  %v2325 = vadd.f32 %v2309, %v2317
  %v2326 = vmul.f32 %v366, %v2298
  %v2327 = vmul.f32 %v370, %v2299
  %v2328 = vmul.f32 %v366, %v2296
  %v2329 = vmul.f32 %v370, %v2297
  %v2330 = vmul.f32 %v366, %v2294
  %v2331 = vmul.f32 %v370, %v2295
  %v2332 = vmul.f32 %v366, %v2300
  %v2333 = vmul.f32 %v370, %v2301
  %v2334 = vsub.f32 %v2302, %v2326
  %v2335 = vsub.f32 %v2303, %v2327
  %v2336 = vsub.f32 %v2304, %v2328
  %v2337 = vsub.f32 %v2305, %v2329
  %v2338 = vsub.f32 %v2306, %v2330
  %v2339 = vsub.f32 %v2307, %v2331
  %v2340 = vsub.f32 %v2308, %v2332
  %v2341 = vsub.f32 %v2309, %v2333
  %v2342 = vsel %vm938, %v2318, %v2334
  %v2343 = vsel %vm938, %v2319, %v2335
  %v2344 = vsel %vm939, %v2320, %v2336
  %v2345 = vsel %vm939, %v2321, %v2337
  %v2346 = vsel %vm940, %v2322, %v2338
  %v2347 = vsel %vm940, %v2323, %v2339
  %v2348 = vsel %vm941, %v2324, %v2340
  %v2349 = vsel %vm941, %v2325, %v2341
  %s2350 = scalar_lea.vmem %s1, 352
  %v2351 = vld [vmem:[%s2350] sm:$0xff]
  %v2352 = vld [vmem:[%s2350 + $0x8] sm:$0xff]
  %v2353 = vld [vmem:[%s2350 + $0x10] sm:$0xff]
  %v2354 = vld [vmem:[%s2350 + $0x18] sm:$0xff]
  %v2356 = vsel %vm431, %v2351, 0
  %v2359 = vsel %vm431, %v2352, 0
  %v2362 = vsel %vm431, %v2353, 0
  %v2365 = vsel %vm431, %v2354, 0
  %2367 = vmatprep.subr.mxu0 %v2343
  %2368 = vmatpush1.msra.mxu0 %v2342
  %2369 = vmatprep.subr.mxu0 %v2345
  %2370 = vmatpush1.msra.mxu0 %v2344
  %2371 = vmatprep.subr.mxu0 %v2347
  %2372 = vmatpush1.msra.mxu0 %v2346
  %2373 = vmatprep.subr.mxu0 %v2349
  %2374 = vmatpush1.msra.mxu0 %v2348
  %2375 = vmatprep.subr.mxu0 0.0
  %2376 = vmatpush1.msra.mxu0 0.0
  %2377 = vmatprep.subr.mxu0 0.0
  %2378 = vmatpush1.msra.mxu0 0.0
  %2379 = vmatprep.subr.mxu0 0.0
  %2380 = vmatpush1.msra.mxu0 0.0
  %2381 = vmatprep.subr.mxu0 0.0
  %2382 = vmatpush1.msra.mxu0 0.0
  %2383 = vmatprep.subr.mxu0 0.0
  %2384 = vmatpush1.msra.mxu0 0.0
  %2385 = vmatprep.subr.mxu0 0.0
  %2386 = vmatpush1.msra.mxu0 0.0
  %2387 = vmatprep.subr.mxu0 0.0
  %2388 = vmatpush1.msra.mxu0 0.0
  %2389 = vmatprep.subr.mxu0 0.0
  %2390 = vmatpush1.msra.mxu0 0.0
  %2391 = vmatprep.subr.mxu0 0.0
  %2392 = vmatpush1.msra.mxu0 0.0
  %2393 = vmatprep.subr.mxu0 0.0
  %2394 = vmatpush1.msra.mxu0 0.0
  %2395 = vmatprep.subr.mxu0 0.0
  %2396 = vmatpush1.msra.mxu0 0.0
  %2397 = vmatprep.subr.mxu0 0.0
  %2398 = vmatpush1.msra.mxu0 0.0
  %2399 = vmatprep.subr.mxu0 0.0
  %2400 = vmatpush1.msra.mxu0 0.0
  %2401 = vmatprep.subr.mxu0 0.0
  %2402 = vmatpush1.msra.mxu0 0.0
  %2403 = vmatprep.subr.mxu0 0.0
  %2404 = vmatpush1.msra.mxu0 0.0
  %2405 = vmatprep.subr.mxu0 0.0
  %2406 = vmatpush1.msra.mxu0 0.0
  %2407 = vmatprep.subr.mxu0 0.0
  %2408 = vmatpush1.msra.mxu0 0.0
  %2409 = vmatprep.subr.mxu0 0.0
  %2410 = vmatpush1.msra.mxu0 0.0
  %2411 = vmatprep.subr.mxu0 0.0
  %2412 = vmatpush1.msra.mxu0 0.0
  %2413 = vmatprep.subr.mxu0 0.0
  %2414 = vmatpush1.msra.mxu0 0.0
  %2415 = vmatprep.subr.mxu0 0.0
  %2416 = vmatpush1.msra.mxu0 0.0
  %2417 = vmatprep.subr.mxu0 0.0
  %2418 = vmatpush1.msra.mxu0 0.0
  %2419 = vmatprep.subr.mxu0 0.0
  %2420 = vmatpush1.msra.mxu0 0.0
  %2421 = vmatprep.subr.mxu0 0.0
  %2422 = vmatpush1.msra.mxu0 0.0
  %2423 = vmatprep.subr.mxu0 0.0
  %2424 = vmatpush1.msra.mxu0 0.0
  %2425 = vmatprep.subr.mxu0 0.0
  %2426 = vmatpush1.msra.mxu0 0.0
  %2427 = vmatprep.subr.mxu0 0.0
  %2428 = vmatpush1.msra.mxu0 0.0
  %2429 = vmatprep.subr.mxu0 0.0
  %2430 = vmatpush1.msra.mxu0 0.0
  %2431 = vmatprep.mubr.f32.mxu0 0.0
  %2432 = vmatmul.mubr.f32.gmra.mrb[0].mxu0 %v2356
  %v2433 = vpop.f32.mrb[0].mxu0
  %v2434 = vadd.f32 0.0, %v2433
  %v2435 = vpop.f32.mrb[0].mxu0
  %v2436 = vadd.f32 0.0, %v2435
  %2437 = vmatprep.mubr.f32.mxu0 0.0
  %2438 = vmatmul.mubr.f32.gmra.mrb[0].mxu0 %v2359
  %v2439 = vpop.f32.mrb[0].mxu0
  %v2440 = vadd.f32 0.0, %v2439
  %v2441 = vpop.f32.mrb[0].mxu0
  %v2442 = vadd.f32 0.0, %v2441
  %2443 = vmatprep.mubr.f32.mxu0 0.0
  %2444 = vmatmul.mubr.f32.gmra.mrb[0].mxu0 %v2362
  %v2445 = vpop.f32.mrb[0].mxu0
  %v2446 = vadd.f32 0.0, %v2445
  %v2447 = vpop.f32.mrb[0].mxu0
  %v2448 = vadd.f32 0.0, %v2447
  %2449 = vmatprep.mubr.f32.mxu0 0.0
  %2450 = vmatmul.mubr.f32.gmra.mrb[0].mxu0 %v2365
  %v2451 = vpop.f32.mrb[0].mxu0
  %v2452 = vadd.f32 0.0, %v2451
  %v2453 = vpop.f32.mrb[0].mxu0
  %v2454 = vadd.f32 0.0, %v2453
  %2455 = vdwg.mxu0
  %v2456 = vmul.f32 %v2436, %v2434
  %v2457 = vmul.f32 %v2442, %v2440
  %v2458 = vmul.f32 %v2448, %v2446
  %v2459 = vmul.f32 %v2454, %v2452
  %v2460 = vadd.f32 %v2456, %v2458
  %v2461 = vadd.f32 %v2457, %v2459
  %v2462 = vadd.f32 %v2460, %v2461
  %v2463 = vrot.slane %v2462, 4
  %v2464 = vadd.f32 %v2462, %v2463
  %v2465 = vrot.slane %v2464, 2
  %v2466 = vadd.f32 %v2464, %v2465
  %v2467 = vrot.slane %v2466, 1
  %v2468 = vadd.f32 %v2466, %v2467
  %v2469 = vmul.f32 %v2436, %v2446
  %v2470 = vmul.f32 %v2442, %v2452
  %v2471 = vmul.f32 %v2448, %v2434
  %v2472 = vmul.f32 %v2454, %v2440
  %v2473 = vsub.f32 %v2469, %v2471
  %v2474 = vsub.f32 %v2470, %v2472
  %v2475 = vadd.f32 %v2473, %v2474
  %v2476 = vrot.slane %v2475, 4
  %v2477 = vadd.f32 %v2475, %v2476
  %v2478 = vrot.slane %v2477, 2
  %v2479 = vadd.f32 %v2477, %v2478
  %v2480 = vrot.slane %v2479, 1
  %v2481 = vadd.f32 %v2479, %v2480
  %v2482 = vmul.f32 %v2468, %v2468
  %v2483 = vmul.f32 %v2481, %v2481
  %v2484 = vadd.f32 %v2482, %v2483
  %2485 = vst [vmem:[%s2] sm:$0x1] %v2484
  // Predicated region
  $region10: #{qnet_forward.1} parent=0 // pred_check
    _
  $region11: #{qnet_forward.1} parent=0 // pred_check_branch
    %2487 = sbr.rel (0) target = $region13
  $region12: #{qnet_forward.1} parent=0 // pred_region
    _
  $region13: #{qnet_forward.1} parent=0 // pred_fallthru
    _
  // Predicated region
  $region14: #{qnet_forward.1} parent=0 // pred_check
    _
  $region15: #{qnet_forward.1} parent=0 // pred_check_branch
    %2489 = sbr.rel (0) target = $region17
  $region16: #{qnet_forward.1} parent=0 // pred_region
    _
  $region17: #{qnet_forward.1} parent=0 // pred_fallthru
    _

</llo_original>
